<compile_context>
chip_gen: v7x
topology: tpu7x:2x2x1
jax: 0.10.0
libtpu: 0.0.40
codegen_flags: <defaults>
</compile_context>

<pallas_src>
import math
import functools

import jax
import jax.numpy as jnp
from jax.experimental import pallas as pl
from jax.experimental.pallas import tpu as pltpu


def _const_index(b, nd):
    return (0,) * nd


def _transformer_kernel(nhead, eps,
                        x_ref, pos_ref, bias_ref, w_in_ref, b_in_ref,
                        wqkv_ref, bqkv_ref, wo_ref, bo_ref,
                        w1_ref, b1_ref, w2_ref, b2_ref,
                        g1_ref, be1_ref, g2_ref, be2_ref,
                        w_fc_ref, b_fc_ref, out_ref):
    # Single grid step == whole batch (batch folded into the token/sublane axis).
    BT, S, IN = x_ref.shape
    N = BT * S
    D = w_in_ref.shape[1]
    L = wqkv_ref.shape[0]
    H = nhead
    hd = D // H
    scale = 1.0 / math.sqrt(hd)
    inv_d = 1.0 / D

    x = x_ref[...].reshape(N, IN)                            # (N, IN), N = B*S

    # ---- input projection (all B*S tokens at once) ----
    if IN == 1:
        h = x * w_in_ref[...] + b_in_ref[...]                # (N,1)*(1,D) broadcast
    else:
        h = jnp.dot(x, w_in_ref[...],
                    preferred_element_type=jnp.float32) + b_in_ref[...]

    # ---- positional encoding: plain broadcast add (pos pre-tiled per batch) ----
    h = h + pos_ref[...]                                     # (N, D)

    # Additive block-diagonal attention bias (0 within a batch element, -1e30
    # across batch elements) so attention over the folded token axis never mixes
    # batch elements.
    bias = bias_ref[...]                                     # (N, N)

    def layer_norm(y, gamma, beta):
        # One fused XLU pass: reduce [y ; y*y] together, var = E[y^2] - E[y]^2.
        stacked = jnp.concatenate([y, y * y], axis=0)        # (2N, D)
        stats = jnp.sum(stacked, axis=-1, keepdims=True) * inv_d   # (2N, 1)
        mu = stats[0:N]
        ms = stats[N:2 * N]
        var = ms - mu * mu
        return (y - mu) * jax.lax.rsqrt(var + eps) * gamma + beta

    # TODO(synk): for num_layers >> 2, turn this static unroll into a grid axis
    # with per-layer weight BlockSpecs (pipelined weight prefetch).
    for l in range(L):
        # ---- self-attention ----
        # Combined QKV projection: one (N,D)@(D,3D) MXU matmul for all tokens.
        qkv = jnp.dot(h, wqkv_ref[l],
                      preferred_element_type=jnp.float32) + bqkv_ref[l]      # (N,3D)
        q = qkv[:, 0:D]
        k = qkv[:, D:2 * D]
        v = qkv[:, 2 * D:3 * D]

        # TODO(synk): for H > 2 replace this static head unroll with a
        # head-batched einsum on (H, N, hd)-shaped operands.
        o_heads = []
        for hh in range(H):
            lo = hh * hd
            qh = q[:, lo:lo + hd]                            # (N, hd)
            kh = k[:, lo:lo + hd]
            vh = v[:, lo:lo + hd]
            # scores over ALL B*S tokens; cross-batch entries masked by `bias`.
            s = jax.lax.dot_general(
                qh, kh, (((1,), (1,)), ((), ())),
                preferred_element_type=jnp.float32) * scale + bias           # (N,N)
            s = s - jnp.max(s, axis=-1, keepdims=True)
            e = jnp.exp(s)
            p = e * pl.reciprocal(jnp.sum(e, axis=-1, keepdims=True),
                                  approx=True)               # EUP reciprocal
            o_heads.append(jnp.dot(p, vh,
                                   preferred_element_type=jnp.float32))      # (N,hd)

        # concat(heads) @ Wo: the head reduction happens inside this single MXU
        # contraction (no per-head VPU adds, no (H,S,D) intermediate).
        o = jnp.concatenate(o_heads, axis=-1)                # (N, D)
        attn = jnp.dot(o, wo_ref[l],
                       preferred_element_type=jnp.float32) + bo_ref[l]       # (N, D)
        h = layer_norm(h + attn, g1_ref[l], be1_ref[l])

        # ---- feed-forward (relu), also over all B*S tokens at once ----
        ff = jnp.dot(h, w1_ref[l], preferred_element_type=jnp.float32) + b1_ref[l]
        ff = jnp.maximum(ff, 0.0)
        ff = jnp.dot(ff, w2_ref[l], preferred_element_type=jnp.float32) + b2_ref[l]
        h = layer_norm(h + ff, g2_ref[l], be2_ref[l])

    # ---- AdaptiveAvgPool1d(1) over sequence (per batch element), then fc ----
    pooled = jnp.mean(h.reshape(BT, S, D), axis=1)           # (BT, D)
    # (1,D) x (BT,D) contracted on D -> lane-dense (1, BT) output block.
    out = jax.lax.dot_general(w_fc_ref[...], pooled,
                              (((1,), (1,)), ((), ())),
                              preferred_element_type=jnp.float32) + b_fc_ref[...]
    out_ref[...] = out                                       # (1, BT)


def transformer_forward(x, params, nhead=2):
    B, S, IN = x.shape
    D = params["w_in"].shape[1]
    N = B * S

    # Positional encoding pre-tiled per batch element (broadcast add in-kernel).
    pos_tiled = jnp.tile(params["pos"][:S], (B, 1))          # (N, D)

    # Block-diagonal additive attention bias: 0 within a batch element, -1e30
    # across batch elements (cross-batch softmax weights underflow to exactly 0).
    bid = jnp.arange(N, dtype=jnp.int32) // S
    attn_bias = jnp.where(bid[:, None] == bid[None, :], 0.0, -1e30).astype(jnp.float32)

    args = [x, pos_tiled, attn_bias,
            params["w_in"], params["b_in"],
            params["wqkv"], params["bqkv"], params["wo"], params["bo"],
            params["w1"], params["b1"], params["w2"], params["b2"],
            params["g1"], params["be1"], params["g2"], params["be2"],
            params["w_fc"], params["b_fc"]]

    # Everything is a full-shape, constant-index block: one grid step does the
    # whole batch.  TODO(synk): set vmem_limit_bytes and single-buffer the
    # invariant weights once d_model / dim_ff / num_layers grow.
    in_specs = [pl.BlockSpec(a.shape, functools.partial(_const_index, nd=a.ndim))
                for a in args]

    out = pl.pallas_call(
        functools.partial(_transformer_kernel, nhead, 1e-5),
        out_shape=jax.ShapeDtypeStruct((1, B), jnp.float32),
        grid=(1,),
        in_specs=in_specs,
        out_specs=pl.BlockSpec((1, B), lambda i: (0, 0)),
        compiler_params=pltpu.CompilerParams(dimension_semantics=("arbitrary",)),
    )(*args)
    return out.reshape(B, 1)


def reference_forward(x, params, nhead=2):
    """Pure-JAX reference with identical semantics (for validation)."""
    B, S, IN = x.shape
    D = params["w_in"].shape[1]
    L = params["wqkv"].shape[0]
    H, hd = nhead, D // nhead

    h = x @ params["w_in"] + params["b_in"]                  # (B, S, D)
    h = h + params["pos"][:S][None]

    def ln(y, g, b):
        mu = y.mean(-1, keepdims=True)
        var = ((y - mu) ** 2).mean(-1, keepdims=True)
        return (y - mu) / jnp.sqrt(var + 1e-5) * g + b

    for l in range(L):
        qkv = h @ params["wqkv"][l] + params["bqkv"][l]      # (B, S, 3D)
        qkv = qkv.reshape(B, S, 3, H, hd)
        q = jnp.transpose(qkv[:, :, 0], (0, 2, 1, 3))        # (B, H, S, hd)
        k = jnp.transpose(qkv[:, :, 1], (0, 2, 1, 3))
        v = jnp.transpose(qkv[:, :, 2], (0, 2, 1, 3))
        s = jnp.einsum('bhqf,bhkf->bhqk', q, k) / math.sqrt(hd)
        p = jax.nn.softmax(s, axis=-1)
        o = jnp.einsum('bhqk,bhkf->bhqf', p, v)
        o = jnp.transpose(o, (0, 2, 1, 3)).reshape(B, S, D)
        attn = o @ params["wo"][l] + params["bo"][l]
        h = ln(h + attn, params["g1"][l], params["be1"][l])
        ff = jnp.maximum(h @ params["w1"][l] + params["b1"][l], 0.0)
        ff = ff @ params["w2"][l] + params["b2"][l]
        h = ln(h + ff, params["g2"][l], params["be2"][l])

    pooled = h.mean(axis=1)                                  # (B, D)
    return pooled @ params["w_fc"].T + params["b_fc"]


def init_params(key, input_size=1, d_model=64, num_layers=2, dim_ff=256):
    ks = jax.random.split(key, 12)

    def nrm(k, shape, scale=0.05):
        return scale * jax.random.normal(k, shape, dtype=jnp.float32)

    L, D, FF = num_layers, d_model, dim_ff
    return {
        "pos":  nrm(ks[0], (1000, D), 0.1),
        "w_in": nrm(ks[1], (input_size, D)),
        "b_in": nrm(ks[2], (1, D)),
        "wqkv": nrm(ks[3], (L, D, 3 * D)),
        "bqkv": nrm(ks[4], (L, 1, 3 * D)),
        "wo":   nrm(ks[5], (L, D, D)),
        "bo":   nrm(ks[6], (L, 1, D)),
        "w1":   nrm(ks[7], (L, D, FF)),
        "b1":   nrm(ks[8], (L, 1, FF)),
        "w2":   nrm(ks[9], (L, FF, D)),
        "b2":   nrm(ks[10], (L, 1, D)),
        "g1":   jnp.ones((L, 1, D), jnp.float32),
        "be1":  jnp.zeros((L, 1, D), jnp.float32),
        "g2":   jnp.ones((L, 1, D), jnp.float32),
        "be2":  jnp.zeros((L, 1, D), jnp.float32),
        "w_fc": nrm(ks[11], (1, D)),            # PyTorch fc.weight layout (out, in)
        "b_fc": jnp.zeros((1, 1), jnp.float32),
    }


if __name__ == "__main__":
    B, S, IN = 2, 8, 1       # batch=2, seq_len=8, input_size=1 (module default)
    key = jax.random.PRNGKey(0)
    kx, kp = jax.random.split(key)

    x = jax.random.normal(kx, (B, S, IN), dtype=jnp.float32)
    params = init_params(kp, input_size=IN, d_model=64, num_layers=2, dim_ff=256)

    out = jax.block_until_ready(transformer_forward(x, params, nhead=2))
    ref = reference_forward(x, params, nhead=2)

    assert out.shape == (B, 1)
    err = float(jnp.max(jnp.abs(out - ref)))
    # All-f32 math except the softmax denominator (EUP approximate reciprocal)
    # and the E[x^2]-E[x]^2 layernorm variance form; 5e-3 gives ample margin.
    assert err < 5e-3, (err, out, ref)

    print("KERNEL_OK")
</pallas_src>

<mosaic_0001>
module attributes {stable_mosaic.version = 11 : i64} {
  func.func @_transformer_kernel(%arg0: i32, %arg1: memref<2x8x1xf32, #tpu.memory_space<vmem>>, %arg2: memref<16x64xf32, #tpu.memory_space<vmem>>, %arg3: memref<16x16xf32, #tpu.memory_space<vmem>>, %arg4: memref<1x64xf32, #tpu.memory_space<vmem>>, %arg5: memref<1x64xf32, #tpu.memory_space<vmem>>, %arg6: memref<2x64x192xf32, #tpu.memory_space<vmem>>, %arg7: memref<2x1x192xf32, #tpu.memory_space<vmem>>, %arg8: memref<2x64x64xf32, #tpu.memory_space<vmem>>, %arg9: memref<2x1x64xf32, #tpu.memory_space<vmem>>, %arg10: memref<2x64x256xf32, #tpu.memory_space<vmem>>, %arg11: memref<2x1x256xf32, #tpu.memory_space<vmem>>, %arg12: memref<2x256x64xf32, #tpu.memory_space<vmem>>, %arg13: memref<2x1x64xf32, #tpu.memory_space<vmem>>, %arg14: memref<2x1x64xf32, #tpu.memory_space<vmem>>, %arg15: memref<2x1x64xf32, #tpu.memory_space<vmem>>, %arg16: memref<2x1x64xf32, #tpu.memory_space<vmem>>, %arg17: memref<2x1x64xf32, #tpu.memory_space<vmem>>, %arg18: memref<1x64xf32, #tpu.memory_space<vmem>>, %arg19: memref<1x1xf32, #tpu.memory_space<vmem>>, %arg20: memref<1x2xf32, #tpu.memory_space<vmem>>) attributes {dimension_semantics = [#tpu.dimension_semantics<arbitrary>], iteration_bounds = array<i64: 1>, scalar_prefetch = 0 : i64, scratch_operands = 0 : i64, tpu.core_type = #tpu.core_type<tc>, window_params = [{pipeline_mode = #tpu.pipeline_mode<synchronous>, transform_indices = @transform_0, window_bounds = array<i64: 2, 8, 1>}, {pipeline_mode = #tpu.pipeline_mode<synchronous>, transform_indices = @transform_1, window_bounds = array<i64: 16, 64>}, {pipeline_mode = #tpu.pipeline_mode<synchronous>, transform_indices = @transform_2, window_bounds = array<i64: 16, 16>}, {pipeline_mode = #tpu.pipeline_mode<synchronous>, transform_indices = @transform_3, window_bounds = array<i64: 1, 64>}, {pipeline_mode = #tpu.pipeline_mode<synchronous>, transform_indices = @transform_4, window_bounds = array<i64: 1, 64>}, {pipeline_mode = #tpu.pipeline_mode<synchronous>, transform_indices = @transform_5, window_bounds = array<i64: 2, 64, 192>}, {pipeline_mode = #tpu.pipeline_mode<synchronous>, transform_indices = @transform_6, window_bounds = array<i64: 2, 1, 192>}, {pipeline_mode = #tpu.pipeline_mode<synchronous>, transform_indices = @transform_7, window_bounds = array<i64: 2, 64, 64>}, {pipeline_mode = #tpu.pipeline_mode<synchronous>, transform_indices = @transform_8, window_bounds = array<i64: 2, 1, 64>}, {pipeline_mode = #tpu.pipeline_mode<synchronous>, transform_indices = @transform_9, window_bounds = array<i64: 2, 64, 256>}, {pipeline_mode = #tpu.pipeline_mode<synchronous>, transform_indices = @transform_10, window_bounds = array<i64: 2, 1, 256>}, {pipeline_mode = #tpu.pipeline_mode<synchronous>, transform_indices = @transform_11, window_bounds = array<i64: 2, 256, 64>}, {pipeline_mode = #tpu.pipeline_mode<synchronous>, transform_indices = @transform_12, window_bounds = array<i64: 2, 1, 64>}, {pipeline_mode = #tpu.pipeline_mode<synchronous>, transform_indices = @transform_13, window_bounds = array<i64: 2, 1, 64>}, {pipeline_mode = #tpu.pipeline_mode<synchronous>, transform_indices = @transform_14, window_bounds = array<i64: 2, 1, 64>}, {pipeline_mode = #tpu.pipeline_mode<synchronous>, transform_indices = @transform_15, window_bounds = array<i64: 2, 1, 64>}, {pipeline_mode = #tpu.pipeline_mode<synchronous>, transform_indices = @transform_16, window_bounds = array<i64: 2, 1, 64>}, {pipeline_mode = #tpu.pipeline_mode<synchronous>, transform_indices = @transform_17, window_bounds = array<i64: 1, 64>}, {pipeline_mode = #tpu.pipeline_mode<synchronous>, transform_indices = @transform_18, window_bounds = array<i64: 1, 1>}, {pipeline_mode = #tpu.pipeline_mode<synchronous>, transform_indices = @transform_19, window_bounds = array<i64: 1, 2>}]} {
    %c0 = arith.constant 0 : index
    %c0_0 = arith.constant 0 : index
    %c0_1 = arith.constant 0 : index
    %0 = vector.load %arg1[%c0, %c0_0, %c0_1] : memref<2x8x1xf32, #tpu.memory_space<vmem>>, vector<2x8x1xf32>
    %1 = vector.shape_cast %0 : vector<2x8x1xf32> to vector<16x1xf32>
    %c0_2 = arith.constant 0 : index
    %c0_3 = arith.constant 0 : index
    %2 = vector.load %arg4[%c0_2, %c0_3] : memref<1x64xf32, #tpu.memory_space<vmem>>, vector<1x64xf32>
    %3 = vector.broadcast %1 : vector<16x1xf32> to vector<16x64xf32>
    %4 = vector.broadcast %2 : vector<1x64xf32> to vector<16x64xf32>
    %5 = arith.mulf %3, %4 : vector<16x64xf32>
    %c0_4 = arith.constant 0 : index
    %c0_5 = arith.constant 0 : index
    %6 = vector.load %arg5[%c0_4, %c0_5] : memref<1x64xf32, #tpu.memory_space<vmem>>, vector<1x64xf32>
    %7 = vector.broadcast %6 : vector<1x64xf32> to vector<16x64xf32>
    %8 = arith.addf %5, %7 : vector<16x64xf32>
    %c0_6 = arith.constant 0 : index
    %c0_7 = arith.constant 0 : index
    %9 = vector.load %arg2[%c0_6, %c0_7] : memref<16x64xf32, #tpu.memory_space<vmem>>, vector<16x64xf32>
    %10 = arith.addf %8, %9 : vector<16x64xf32>
    %c0_8 = arith.constant 0 : index
    %c0_9 = arith.constant 0 : index
    %11 = vector.load %arg3[%c0_8, %c0_9] : memref<16x16xf32, #tpu.memory_space<vmem>>, vector<16x16xf32>
    %c0_10 = arith.constant 0 : index
    %c0_11 = arith.constant 0 : index
    %c0_12 = arith.constant 0 : index
    %12 = vector.load %arg6[%c0_10, %c0_11, %c0_12] : memref<2x64x192xf32, #tpu.memory_space<vmem>>, vector<1x64x192xf32>
    %13 = vector.shape_cast %12 : vector<1x64x192xf32> to vector<64x192xf32>
    %cst = arith.constant dense<0.000000e+00> : vector<16x192xf32>
    %14 = tpu.matmul %10, %13, %cst {dimension_numbers = #tpu.dot_dimension_numbers<[1], [0], [0], [1], [0, 0, 1, 1], [], []>} : vector<16x64xf32>, vector<64x192xf32>, vector<16x192xf32> -> vector<16x192xf32>
    %c0_13 = arith.constant 0 : index
    %c0_14 = arith.constant 0 : index
    %c0_15 = arith.constant 0 : index
    %15 = vector.load %arg7[%c0_13, %c0_14, %c0_15] : memref<2x1x192xf32, #tpu.memory_space<vmem>>, vector<1x1x192xf32>
    %16 = vector.shape_cast %15 : vector<1x1x192xf32> to vector<1x192xf32>
    %17 = vector.broadcast %16 : vector<1x192xf32> to vector<16x192xf32>
    %18 = arith.addf %14, %17 : vector<16x192xf32>
    %19 = vector.extract_strided_slice %18 {offsets = [0, 0], sizes = [16, 64], strides = [1, 1]} : vector<16x192xf32> to vector<16x64xf32>
    %20 = vector.extract_strided_slice %18 {offsets = [0, 64], sizes = [16, 64], strides = [1, 1]} : vector<16x192xf32> to vector<16x64xf32>
    %21 = vector.extract_strided_slice %18 {offsets = [0, 128], sizes = [16, 64], strides = [1, 1]} : vector<16x192xf32> to vector<16x64xf32>
    %22 = vector.extract_strided_slice %19 {offsets = [0, 0], sizes = [16, 32], strides = [1, 1]} : vector<16x64xf32> to vector<16x32xf32>
    %23 = vector.extract_strided_slice %20 {offsets = [0, 0], sizes = [16, 32], strides = [1, 1]} : vector<16x64xf32> to vector<16x32xf32>
    %24 = vector.extract_strided_slice %21 {offsets = [0, 0], sizes = [16, 32], strides = [1, 1]} : vector<16x64xf32> to vector<16x32xf32>
    %cst_16 = arith.constant dense<0.000000e+00> : vector<16x16xf32>
    %25 = tpu.matmul %22, %23, %cst_16 {dimension_numbers = #tpu.dot_dimension_numbers<[1], [1], [0], [0], [0, 0, 1, 0], [], []>} : vector<16x32xf32>, vector<16x32xf32>, vector<16x16xf32> -> vector<16x16xf32>
    %cst_17 = arith.constant 0.176776692 : f32
    %26 = vector.broadcast %cst_17 : f32 to vector<16x16xf32>
    %27 = arith.mulf %25, %26 : vector<16x16xf32>
    %28 = arith.addf %27, %11 : vector<16x16xf32>
    %cst_18 = arith.constant dense<0xFF800000> : vector<16xf32>
    %29 = vector.multi_reduction <maximumf>, %28, %cst_18 [1] : vector<16x16xf32> to vector<16xf32>
    %30 = vector.shape_cast %29 : vector<16xf32> to vector<16x1xf32>
    %31 = vector.broadcast %30 : vector<16x1xf32> to vector<16x16xf32>
    %32 = arith.subf %28, %31 : vector<16x16xf32>
    %33 = math.exp %32 : vector<16x16xf32>
    %cst_19 = arith.constant dense<0.000000e+00> : vector<16xf32>
    %34 = vector.multi_reduction <add>, %33, %cst_19 [1] : vector<16x16xf32> to vector<16xf32>
    %35 = vector.shape_cast %34 : vector<16xf32> to vector<16x1xf32>
    %36 = tpu.reciprocal %35 {approx = true} : vector<16x1xf32> -> vector<16x1xf32>
    %37 = vector.broadcast %36 : vector<16x1xf32> to vector<16x16xf32>
    %38 = arith.mulf %33, %37 : vector<16x16xf32>
    %cst_20 = arith.constant dense<0.000000e+00> : vector<16x32xf32>
    %39 = tpu.matmul %38, %24, %cst_20 {dimension_numbers = #tpu.dot_dimension_numbers<[1], [0], [0], [1], [0, 0, 1, 1], [], []>} : vector<16x16xf32>, vector<16x32xf32>, vector<16x32xf32> -> vector<16x32xf32>
    %40 = vector.extract_strided_slice %19 {offsets = [0, 32], sizes = [16, 32], strides = [1, 1]} : vector<16x64xf32> to vector<16x32xf32>
    %41 = vector.extract_strided_slice %20 {offsets = [0, 32], sizes = [16, 32], strides = [1, 1]} : vector<16x64xf32> to vector<16x32xf32>
    %42 = vector.extract_strided_slice %21 {offsets = [0, 32], sizes = [16, 32], strides = [1, 1]} : vector<16x64xf32> to vector<16x32xf32>
    %cst_21 = arith.constant dense<0.000000e+00> : vector<16x16xf32>
    %43 = tpu.matmul %40, %41, %cst_21 {dimension_numbers = #tpu.dot_dimension_numbers<[1], [1], [0], [0], [0, 0, 1, 0], [], []>} : vector<16x32xf32>, vector<16x32xf32>, vector<16x16xf32> -> vector<16x16xf32>
    %cst_22 = arith.constant 0.176776692 : f32
    %44 = vector.broadcast %cst_22 : f32 to vector<16x16xf32>
    %45 = arith.mulf %43, %44 : vector<16x16xf32>
    %46 = arith.addf %45, %11 : vector<16x16xf32>
    %cst_23 = arith.constant dense<0xFF800000> : vector<16xf32>
    %47 = vector.multi_reduction <maximumf>, %46, %cst_23 [1] : vector<16x16xf32> to vector<16xf32>
    %48 = vector.shape_cast %47 : vector<16xf32> to vector<16x1xf32>
    %49 = vector.broadcast %48 : vector<16x1xf32> to vector<16x16xf32>
    %50 = arith.subf %46, %49 : vector<16x16xf32>
    %51 = math.exp %50 : vector<16x16xf32>
    %cst_24 = arith.constant dense<0.000000e+00> : vector<16xf32>
    %52 = vector.multi_reduction <add>, %51, %cst_24 [1] : vector<16x16xf32> to vector<16xf32>
    %53 = vector.shape_cast %52 : vector<16xf32> to vector<16x1xf32>
    %54 = tpu.reciprocal %53 {approx = true} : vector<16x1xf32> -> vector<16x1xf32>
    %55 = vector.broadcast %54 : vector<16x1xf32> to vector<16x16xf32>
    %56 = arith.mulf %51, %55 : vector<16x16xf32>
    %cst_25 = arith.constant dense<0.000000e+00> : vector<16x32xf32>
    %57 = tpu.matmul %56, %42, %cst_25 {dimension_numbers = #tpu.dot_dimension_numbers<[1], [0], [0], [1], [0, 0, 1, 1], [], []>} : vector<16x16xf32>, vector<16x32xf32>, vector<16x32xf32> -> vector<16x32xf32>
    %58 = tpu.concatenate %39, %57 in 1 : vector<16x32xf32>, vector<16x32xf32> -> vector<16x64xf32>
    %c0_26 = arith.constant 0 : index
    %c0_27 = arith.constant 0 : index
    %c0_28 = arith.constant 0 : index
    %59 = vector.load %arg8[%c0_26, %c0_27, %c0_28] : memref<2x64x64xf32, #tpu.memory_space<vmem>>, vector<1x64x64xf32>
    %60 = vector.shape_cast %59 : vector<1x64x64xf32> to vector<64x64xf32>
    %cst_29 = arith.constant dense<0.000000e+00> : vector<16x64xf32>
    %61 = tpu.matmul %58, %60, %cst_29 {dimension_numbers = #tpu.dot_dimension_numbers<[1], [0], [0], [1], [0, 0, 1, 1], [], []>} : vector<16x64xf32>, vector<64x64xf32>, vector<16x64xf32> -> vector<16x64xf32>
    %c0_30 = arith.constant 0 : index
    %c0_31 = arith.constant 0 : index
    %c0_32 = arith.constant 0 : index
    %62 = vector.load %arg9[%c0_30, %c0_31, %c0_32] : memref<2x1x64xf32, #tpu.memory_space<vmem>>, vector<1x1x64xf32>
    %63 = vector.shape_cast %62 : vector<1x1x64xf32> to vector<1x64xf32>
    %64 = vector.broadcast %63 : vector<1x64xf32> to vector<16x64xf32>
    %65 = arith.addf %61, %64 : vector<16x64xf32>
    %66 = arith.addf %10, %65 : vector<16x64xf32>
    %c0_33 = arith.constant 0 : index
    %c0_34 = arith.constant 0 : index
    %c0_35 = arith.constant 0 : index
    %67 = vector.load %arg14[%c0_33, %c0_34, %c0_35] : memref<2x1x64xf32, #tpu.memory_space<vmem>>, vector<1x1x64xf32>
    %68 = vector.shape_cast %67 : vector<1x1x64xf32> to vector<1x64xf32>
    %c0_36 = arith.constant 0 : index
    %c0_37 = arith.constant 0 : index
    %c0_38 = arith.constant 0 : index
    %69 = vector.load %arg15[%c0_36, %c0_37, %c0_38] : memref<2x1x64xf32, #tpu.memory_space<vmem>>, vector<1x1x64xf32>
    %70 = vector.shape_cast %69 : vector<1x1x64xf32> to vector<1x64xf32>
    %71 = arith.mulf %66, %66 : vector<16x64xf32>
    %72 = tpu.concatenate %66, %71 in 0 : vector<16x64xf32>, vector<16x64xf32> -> vector<32x64xf32>
    %cst_39 = arith.constant dense<0.000000e+00> : vector<32xf32>
    %73 = vector.multi_reduction <add>, %72, %cst_39 [1] : vector<32x64xf32> to vector<32xf32>
    %74 = vector.shape_cast %73 : vector<32xf32> to vector<32x1xf32>
    %cst_40 = arith.constant 1.562500e-02 : f32
    %75 = vector.broadcast %cst_40 : f32 to vector<32x1xf32>
    %76 = arith.mulf %74, %75 : vector<32x1xf32>
    %77 = vector.extract_strided_slice %76 {offsets = [0, 0], sizes = [16, 1], strides = [1, 1]} : vector<32x1xf32> to vector<16x1xf32>
    %78 = vector.extract_strided_slice %76 {offsets = [16, 0], sizes = [16, 1], strides = [1, 1]} : vector<32x1xf32> to vector<16x1xf32>
    %79 = arith.mulf %77, %77 : vector<16x1xf32>
    %80 = arith.subf %78, %79 : vector<16x1xf32>
    %81 = vector.broadcast %77 : vector<16x1xf32> to vector<16x64xf32>
    %82 = arith.subf %66, %81 : vector<16x64xf32>
    %cst_41 = arith.constant 9.99999974E-6 : f32
    %83 = vector.broadcast %cst_41 : f32 to vector<16x1xf32>
    %84 = arith.addf %80, %83 : vector<16x1xf32>
    %85 = math.rsqrt %84 : vector<16x1xf32>
    %86 = vector.broadcast %85 : vector<16x1xf32> to vector<16x64xf32>
    %87 = arith.mulf %82, %86 : vector<16x64xf32>
    %88 = vector.broadcast %68 : vector<1x64xf32> to vector<16x64xf32>
    %89 = arith.mulf %87, %88 : vector<16x64xf32>
    %90 = vector.broadcast %70 : vector<1x64xf32> to vector<16x64xf32>
    %91 = arith.addf %89, %90 : vector<16x64xf32>
    %c0_42 = arith.constant 0 : index
    %c0_43 = arith.constant 0 : index
    %c0_44 = arith.constant 0 : index
    %92 = vector.load %arg10[%c0_42, %c0_43, %c0_44] : memref<2x64x256xf32, #tpu.memory_space<vmem>>, vector<1x64x256xf32>
    %93 = vector.shape_cast %92 : vector<1x64x256xf32> to vector<64x256xf32>
    %cst_45 = arith.constant dense<0.000000e+00> : vector<16x256xf32>
    %94 = tpu.matmul %91, %93, %cst_45 {dimension_numbers = #tpu.dot_dimension_numbers<[1], [0], [0], [1], [0, 0, 1, 1], [], []>} : vector<16x64xf32>, vector<64x256xf32>, vector<16x256xf32> -> vector<16x256xf32>
    %c0_46 = arith.constant 0 : index
    %c0_47 = arith.constant 0 : index
    %c0_48 = arith.constant 0 : index
    %95 = vector.load %arg11[%c0_46, %c0_47, %c0_48] : memref<2x1x256xf32, #tpu.memory_space<vmem>>, vector<1x1x256xf32>
    %96 = vector.shape_cast %95 : vector<1x1x256xf32> to vector<1x256xf32>
    %97 = vector.broadcast %96 : vector<1x256xf32> to vector<16x256xf32>
    %98 = arith.addf %94, %97 : vector<16x256xf32>
    %cst_49 = arith.constant 0.000000e+00 : f32
    %99 = vector.broadcast %cst_49 : f32 to vector<16x256xf32>
    %100 = arith.maximumf %98, %99 : vector<16x256xf32>
    %c0_50 = arith.constant 0 : index
    %c0_51 = arith.constant 0 : index
    %c0_52 = arith.constant 0 : index
    %101 = vector.load %arg12[%c0_50, %c0_51, %c0_52] : memref<2x256x64xf32, #tpu.memory_space<vmem>>, vector<1x256x64xf32>
    %102 = vector.shape_cast %101 : vector<1x256x64xf32> to vector<256x64xf32>
    %cst_53 = arith.constant dense<0.000000e+00> : vector<16x64xf32>
    %103 = tpu.matmul %100, %102, %cst_53 {dimension_numbers = #tpu.dot_dimension_numbers<[1], [0], [0], [1], [0, 0, 1, 1], [], []>} : vector<16x256xf32>, vector<256x64xf32>, vector<16x64xf32> -> vector<16x64xf32>
    %c0_54 = arith.constant 0 : index
    %c0_55 = arith.constant 0 : index
    %c0_56 = arith.constant 0 : index
    %104 = vector.load %arg13[%c0_54, %c0_55, %c0_56] : memref<2x1x64xf32, #tpu.memory_space<vmem>>, vector<1x1x64xf32>
    %105 = vector.shape_cast %104 : vector<1x1x64xf32> to vector<1x64xf32>
    %106 = vector.broadcast %105 : vector<1x64xf32> to vector<16x64xf32>
    %107 = arith.addf %103, %106 : vector<16x64xf32>
    %108 = arith.addf %91, %107 : vector<16x64xf32>
    %c0_57 = arith.constant 0 : index
    %c0_58 = arith.constant 0 : index
    %c0_59 = arith.constant 0 : index
    %109 = vector.load %arg16[%c0_57, %c0_58, %c0_59] : memref<2x1x64xf32, #tpu.memory_space<vmem>>, vector<1x1x64xf32>
    %110 = vector.shape_cast %109 : vector<1x1x64xf32> to vector<1x64xf32>
    %c0_60 = arith.constant 0 : index
    %c0_61 = arith.constant 0 : index
    %c0_62 = arith.constant 0 : index
    %111 = vector.load %arg17[%c0_60, %c0_61, %c0_62] : memref<2x1x64xf32, #tpu.memory_space<vmem>>, vector<1x1x64xf32>
    %112 = vector.shape_cast %111 : vector<1x1x64xf32> to vector<1x64xf32>
    %113 = arith.mulf %108, %108 : vector<16x64xf32>
    %114 = tpu.concatenate %108, %113 in 0 : vector<16x64xf32>, vector<16x64xf32> -> vector<32x64xf32>
    %cst_63 = arith.constant dense<0.000000e+00> : vector<32xf32>
    %115 = vector.multi_reduction <add>, %114, %cst_63 [1] : vector<32x64xf32> to vector<32xf32>
    %116 = vector.shape_cast %115 : vector<32xf32> to vector<32x1xf32>
    %cst_64 = arith.constant 1.562500e-02 : f32
    %117 = vector.broadcast %cst_64 : f32 to vector<32x1xf32>
    %118 = arith.mulf %116, %117 : vector<32x1xf32>
    %119 = vector.extract_strided_slice %118 {offsets = [0, 0], sizes = [16, 1], strides = [1, 1]} : vector<32x1xf32> to vector<16x1xf32>
    %120 = vector.extract_strided_slice %118 {offsets = [16, 0], sizes = [16, 1], strides = [1, 1]} : vector<32x1xf32> to vector<16x1xf32>
    %121 = arith.mulf %119, %119 : vector<16x1xf32>
    %122 = arith.subf %120, %121 : vector<16x1xf32>
    %123 = vector.broadcast %119 : vector<16x1xf32> to vector<16x64xf32>
    %124 = arith.subf %108, %123 : vector<16x64xf32>
    %cst_65 = arith.constant 9.99999974E-6 : f32
    %125 = vector.broadcast %cst_65 : f32 to vector<16x1xf32>
    %126 = arith.addf %122, %125 : vector<16x1xf32>
    %127 = math.rsqrt %126 : vector<16x1xf32>
    %128 = vector.broadcast %127 : vector<16x1xf32> to vector<16x64xf32>
    %129 = arith.mulf %124, %128 : vector<16x64xf32>
    %130 = vector.broadcast %110 : vector<1x64xf32> to vector<16x64xf32>
    %131 = arith.mulf %129, %130 : vector<16x64xf32>
    %132 = vector.broadcast %112 : vector<1x64xf32> to vector<16x64xf32>
    %133 = arith.addf %131, %132 : vector<16x64xf32>
    %c1 = arith.constant 1 : index
    %c0_66 = arith.constant 0 : index
    %c0_67 = arith.constant 0 : index
    %134 = vector.load %arg6[%c1, %c0_66, %c0_67] : memref<2x64x192xf32, #tpu.memory_space<vmem>>, vector<1x64x192xf32>
    %135 = vector.shape_cast %134 : vector<1x64x192xf32> to vector<64x192xf32>
    %cst_68 = arith.constant dense<0.000000e+00> : vector<16x192xf32>
    %136 = tpu.matmul %133, %135, %cst_68 {dimension_numbers = #tpu.dot_dimension_numbers<[1], [0], [0], [1], [0, 0, 1, 1], [], []>} : vector<16x64xf32>, vector<64x192xf32>, vector<16x192xf32> -> vector<16x192xf32>
    %c1_69 = arith.constant 1 : index
    %c0_70 = arith.constant 0 : index
    %c0_71 = arith.constant 0 : index
    %137 = vector.load %arg7[%c1_69, %c0_70, %c0_71] : memref<2x1x192xf32, #tpu.memory_space<vmem>>, vector<1x1x192xf32>
    %138 = vector.shape_cast %137 : vector<1x1x192xf32> to vector<1x192xf32>
    %139 = vector.broadcast %138 : vector<1x192xf32> to vector<16x192xf32>
    %140 = arith.addf %136, %139 : vector<16x192xf32>
    %141 = vector.extract_strided_slice %140 {offsets = [0, 0], sizes = [16, 64], strides = [1, 1]} : vector<16x192xf32> to vector<16x64xf32>
    %142 = vector.extract_strided_slice %140 {offsets = [0, 64], sizes = [16, 64], strides = [1, 1]} : vector<16x192xf32> to vector<16x64xf32>
    %143 = vector.extract_strided_slice %140 {offsets = [0, 128], sizes = [16, 64], strides = [1, 1]} : vector<16x192xf32> to vector<16x64xf32>
    %144 = vector.extract_strided_slice %141 {offsets = [0, 0], sizes = [16, 32], strides = [1, 1]} : vector<16x64xf32> to vector<16x32xf32>
    %145 = vector.extract_strided_slice %142 {offsets = [0, 0], sizes = [16, 32], strides = [1, 1]} : vector<16x64xf32> to vector<16x32xf32>
    %146 = vector.extract_strided_slice %143 {offsets = [0, 0], sizes = [16, 32], strides = [1, 1]} : vector<16x64xf32> to vector<16x32xf32>
    %cst_72 = arith.constant dense<0.000000e+00> : vector<16x16xf32>
    %147 = tpu.matmul %144, %145, %cst_72 {dimension_numbers = #tpu.dot_dimension_numbers<[1], [1], [0], [0], [0, 0, 1, 0], [], []>} : vector<16x32xf32>, vector<16x32xf32>, vector<16x16xf32> -> vector<16x16xf32>
    %cst_73 = arith.constant 0.176776692 : f32
    %148 = vector.broadcast %cst_73 : f32 to vector<16x16xf32>
    %149 = arith.mulf %147, %148 : vector<16x16xf32>
    %150 = arith.addf %149, %11 : vector<16x16xf32>
    %cst_74 = arith.constant dense<0xFF800000> : vector<16xf32>
    %151 = vector.multi_reduction <maximumf>, %150, %cst_74 [1] : vector<16x16xf32> to vector<16xf32>
    %152 = vector.shape_cast %151 : vector<16xf32> to vector<16x1xf32>
    %153 = vector.broadcast %152 : vector<16x1xf32> to vector<16x16xf32>
    %154 = arith.subf %150, %153 : vector<16x16xf32>
    %155 = math.exp %154 : vector<16x16xf32>
    %cst_75 = arith.constant dense<0.000000e+00> : vector<16xf32>
    %156 = vector.multi_reduction <add>, %155, %cst_75 [1] : vector<16x16xf32> to vector<16xf32>
    %157 = vector.shape_cast %156 : vector<16xf32> to vector<16x1xf32>
    %158 = tpu.reciprocal %157 {approx = true} : vector<16x1xf32> -> vector<16x1xf32>
    %159 = vector.broadcast %158 : vector<16x1xf32> to vector<16x16xf32>
    %160 = arith.mulf %155, %159 : vector<16x16xf32>
    %cst_76 = arith.constant dense<0.000000e+00> : vector<16x32xf32>
    %161 = tpu.matmul %160, %146, %cst_76 {dimension_numbers = #tpu.dot_dimension_numbers<[1], [0], [0], [1], [0, 0, 1, 1], [], []>} : vector<16x16xf32>, vector<16x32xf32>, vector<16x32xf32> -> vector<16x32xf32>
    %162 = vector.extract_strided_slice %141 {offsets = [0, 32], sizes = [16, 32], strides = [1, 1]} : vector<16x64xf32> to vector<16x32xf32>
    %163 = vector.extract_strided_slice %142 {offsets = [0, 32], sizes = [16, 32], strides = [1, 1]} : vector<16x64xf32> to vector<16x32xf32>
    %164 = vector.extract_strided_slice %143 {offsets = [0, 32], sizes = [16, 32], strides = [1, 1]} : vector<16x64xf32> to vector<16x32xf32>
    %cst_77 = arith.constant dense<0.000000e+00> : vector<16x16xf32>
    %165 = tpu.matmul %162, %163, %cst_77 {dimension_numbers = #tpu.dot_dimension_numbers<[1], [1], [0], [0], [0, 0, 1, 0], [], []>} : vector<16x32xf32>, vector<16x32xf32>, vector<16x16xf32> -> vector<16x16xf32>
    %cst_78 = arith.constant 0.176776692 : f32
    %166 = vector.broadcast %cst_78 : f32 to vector<16x16xf32>
    %167 = arith.mulf %165, %166 : vector<16x16xf32>
    %168 = arith.addf %167, %11 : vector<16x16xf32>
    %cst_79 = arith.constant dense<0xFF800000> : vector<16xf32>
    %169 = vector.multi_reduction <maximumf>, %168, %cst_79 [1] : vector<16x16xf32> to vector<16xf32>
    %170 = vector.shape_cast %169 : vector<16xf32> to vector<16x1xf32>
    %171 = vector.broadcast %170 : vector<16x1xf32> to vector<16x16xf32>
    %172 = arith.subf %168, %171 : vector<16x16xf32>
    %173 = math.exp %172 : vector<16x16xf32>
    %cst_80 = arith.constant dense<0.000000e+00> : vector<16xf32>
    %174 = vector.multi_reduction <add>, %173, %cst_80 [1] : vector<16x16xf32> to vector<16xf32>
    %175 = vector.shape_cast %174 : vector<16xf32> to vector<16x1xf32>
    %176 = tpu.reciprocal %175 {approx = true} : vector<16x1xf32> -> vector<16x1xf32>
    %177 = vector.broadcast %176 : vector<16x1xf32> to vector<16x16xf32>
    %178 = arith.mulf %173, %177 : vector<16x16xf32>
    %cst_81 = arith.constant dense<0.000000e+00> : vector<16x32xf32>
    %179 = tpu.matmul %178, %164, %cst_81 {dimension_numbers = #tpu.dot_dimension_numbers<[1], [0], [0], [1], [0, 0, 1, 1], [], []>} : vector<16x16xf32>, vector<16x32xf32>, vector<16x32xf32> -> vector<16x32xf32>
    %180 = tpu.concatenate %161, %179 in 1 : vector<16x32xf32>, vector<16x32xf32> -> vector<16x64xf32>
    %c1_82 = arith.constant 1 : index
    %c0_83 = arith.constant 0 : index
    %c0_84 = arith.constant 0 : index
    %181 = vector.load %arg8[%c1_82, %c0_83, %c0_84] : memref<2x64x64xf32, #tpu.memory_space<vmem>>, vector<1x64x64xf32>
    %182 = vector.shape_cast %181 : vector<1x64x64xf32> to vector<64x64xf32>
    %cst_85 = arith.constant dense<0.000000e+00> : vector<16x64xf32>
    %183 = tpu.matmul %180, %182, %cst_85 {dimension_numbers = #tpu.dot_dimension_numbers<[1], [0], [0], [1], [0, 0, 1, 1], [], []>} : vector<16x64xf32>, vector<64x64xf32>, vector<16x64xf32> -> vector<16x64xf32>
    %c1_86 = arith.constant 1 : index
    %c0_87 = arith.constant 0 : index
    %c0_88 = arith.constant 0 : index
    %184 = vector.load %arg9[%c1_86, %c0_87, %c0_88] : memref<2x1x64xf32, #tpu.memory_space<vmem>>, vector<1x1x64xf32>
    %185 = vector.shape_cast %184 : vector<1x1x64xf32> to vector<1x64xf32>
    %186 = vector.broadcast %185 : vector<1x64xf32> to vector<16x64xf32>
    %187 = arith.addf %183, %186 : vector<16x64xf32>
    %188 = arith.addf %133, %187 : vector<16x64xf32>
    %c1_89 = arith.constant 1 : index
    %c0_90 = arith.constant 0 : index
    %c0_91 = arith.constant 0 : index
    %189 = vector.load %arg14[%c1_89, %c0_90, %c0_91] : memref<2x1x64xf32, #tpu.memory_space<vmem>>, vector<1x1x64xf32>
    %190 = vector.shape_cast %189 : vector<1x1x64xf32> to vector<1x64xf32>
    %c1_92 = arith.constant 1 : index
    %c0_93 = arith.constant 0 : index
    %c0_94 = arith.constant 0 : index
    %191 = vector.load %arg15[%c1_92, %c0_93, %c0_94] : memref<2x1x64xf32, #tpu.memory_space<vmem>>, vector<1x1x64xf32>
    %192 = vector.shape_cast %191 : vector<1x1x64xf32> to vector<1x64xf32>
    %193 = arith.mulf %188, %188 : vector<16x64xf32>
    %194 = tpu.concatenate %188, %193 in 0 : vector<16x64xf32>, vector<16x64xf32> -> vector<32x64xf32>
    %cst_95 = arith.constant dense<0.000000e+00> : vector<32xf32>
    %195 = vector.multi_reduction <add>, %194, %cst_95 [1] : vector<32x64xf32> to vector<32xf32>
    %196 = vector.shape_cast %195 : vector<32xf32> to vector<32x1xf32>
    %cst_96 = arith.constant 1.562500e-02 : f32
    %197 = vector.broadcast %cst_96 : f32 to vector<32x1xf32>
    %198 = arith.mulf %196, %197 : vector<32x1xf32>
    %199 = vector.extract_strided_slice %198 {offsets = [0, 0], sizes = [16, 1], strides = [1, 1]} : vector<32x1xf32> to vector<16x1xf32>
    %200 = vector.extract_strided_slice %198 {offsets = [16, 0], sizes = [16, 1], strides = [1, 1]} : vector<32x1xf32> to vector<16x1xf32>
    %201 = arith.mulf %199, %199 : vector<16x1xf32>
    %202 = arith.subf %200, %201 : vector<16x1xf32>
    %203 = vector.broadcast %199 : vector<16x1xf32> to vector<16x64xf32>
    %204 = arith.subf %188, %203 : vector<16x64xf32>
    %cst_97 = arith.constant 9.99999974E-6 : f32
    %205 = vector.broadcast %cst_97 : f32 to vector<16x1xf32>
    %206 = arith.addf %202, %205 : vector<16x1xf32>
    %207 = math.rsqrt %206 : vector<16x1xf32>
    %208 = vector.broadcast %207 : vector<16x1xf32> to vector<16x64xf32>
    %209 = arith.mulf %204, %208 : vector<16x64xf32>
    %210 = vector.broadcast %190 : vector<1x64xf32> to vector<16x64xf32>
    %211 = arith.mulf %209, %210 : vector<16x64xf32>
    %212 = vector.broadcast %192 : vector<1x64xf32> to vector<16x64xf32>
    %213 = arith.addf %211, %212 : vector<16x64xf32>
    %c1_98 = arith.constant 1 : index
    %c0_99 = arith.constant 0 : index
    %c0_100 = arith.constant 0 : index
    %214 = vector.load %arg10[%c1_98, %c0_99, %c0_100] : memref<2x64x256xf32, #tpu.memory_space<vmem>>, vector<1x64x256xf32>
    %215 = vector.shape_cast %214 : vector<1x64x256xf32> to vector<64x256xf32>
    %cst_101 = arith.constant dense<0.000000e+00> : vector<16x256xf32>
    %216 = tpu.matmul %213, %215, %cst_101 {dimension_numbers = #tpu.dot_dimension_numbers<[1], [0], [0], [1], [0, 0, 1, 1], [], []>} : vector<16x64xf32>, vector<64x256xf32>, vector<16x256xf32> -> vector<16x256xf32>
    %c1_102 = arith.constant 1 : index
    %c0_103 = arith.constant 0 : index
    %c0_104 = arith.constant 0 : index
    %217 = vector.load %arg11[%c1_102, %c0_103, %c0_104] : memref<2x1x256xf32, #tpu.memory_space<vmem>>, vector<1x1x256xf32>
    %218 = vector.shape_cast %217 : vector<1x1x256xf32> to vector<1x256xf32>
    %219 = vector.broadcast %218 : vector<1x256xf32> to vector<16x256xf32>
    %220 = arith.addf %216, %219 : vector<16x256xf32>
    %cst_105 = arith.constant 0.000000e+00 : f32
    %221 = vector.broadcast %cst_105 : f32 to vector<16x256xf32>
    %222 = arith.maximumf %220, %221 : vector<16x256xf32>
    %c1_106 = arith.constant 1 : index
    %c0_107 = arith.constant 0 : index
    %c0_108 = arith.constant 0 : index
    %223 = vector.load %arg12[%c1_106, %c0_107, %c0_108] : memref<2x256x64xf32, #tpu.memory_space<vmem>>, vector<1x256x64xf32>
    %224 = vector.shape_cast %223 : vector<1x256x64xf32> to vector<256x64xf32>
    %cst_109 = arith.constant dense<0.000000e+00> : vector<16x64xf32>
    %225 = tpu.matmul %222, %224, %cst_109 {dimension_numbers = #tpu.dot_dimension_numbers<[1], [0], [0], [1], [0, 0, 1, 1], [], []>} : vector<16x256xf32>, vector<256x64xf32>, vector<16x64xf32> -> vector<16x64xf32>
    %c1_110 = arith.constant 1 : index
    %c0_111 = arith.constant 0 : index
    %c0_112 = arith.constant 0 : index
    %226 = vector.load %arg13[%c1_110, %c0_111, %c0_112] : memref<2x1x64xf32, #tpu.memory_space<vmem>>, vector<1x1x64xf32>
    %227 = vector.shape_cast %226 : vector<1x1x64xf32> to vector<1x64xf32>
    %228 = vector.broadcast %227 : vector<1x64xf32> to vector<16x64xf32>
    %229 = arith.addf %225, %228 : vector<16x64xf32>
    %230 = arith.addf %213, %229 : vector<16x64xf32>
    %c1_113 = arith.constant 1 : index
    %c0_114 = arith.constant 0 : index
    %c0_115 = arith.constant 0 : index
    %231 = vector.load %arg16[%c1_113, %c0_114, %c0_115] : memref<2x1x64xf32, #tpu.memory_space<vmem>>, vector<1x1x64xf32>
    %232 = vector.shape_cast %231 : vector<1x1x64xf32> to vector<1x64xf32>
    %c1_116 = arith.constant 1 : index
    %c0_117 = arith.constant 0 : index
    %c0_118 = arith.constant 0 : index
    %233 = vector.load %arg17[%c1_116, %c0_117, %c0_118] : memref<2x1x64xf32, #tpu.memory_space<vmem>>, vector<1x1x64xf32>
    %234 = vector.shape_cast %233 : vector<1x1x64xf32> to vector<1x64xf32>
    %235 = arith.mulf %230, %230 : vector<16x64xf32>
    %236 = tpu.concatenate %230, %235 in 0 : vector<16x64xf32>, vector<16x64xf32> -> vector<32x64xf32>
    %cst_119 = arith.constant dense<0.000000e+00> : vector<32xf32>
    %237 = vector.multi_reduction <add>, %236, %cst_119 [1] : vector<32x64xf32> to vector<32xf32>
    %238 = vector.shape_cast %237 : vector<32xf32> to vector<32x1xf32>
    %cst_120 = arith.constant 1.562500e-02 : f32
    %239 = vector.broadcast %cst_120 : f32 to vector<32x1xf32>
    %240 = arith.mulf %238, %239 : vector<32x1xf32>
    %241 = vector.extract_strided_slice %240 {offsets = [0, 0], sizes = [16, 1], strides = [1, 1]} : vector<32x1xf32> to vector<16x1xf32>
    %242 = vector.extract_strided_slice %240 {offsets = [16, 0], sizes = [16, 1], strides = [1, 1]} : vector<32x1xf32> to vector<16x1xf32>
    %243 = arith.mulf %241, %241 : vector<16x1xf32>
    %244 = arith.subf %242, %243 : vector<16x1xf32>
    %245 = vector.broadcast %241 : vector<16x1xf32> to vector<16x64xf32>
    %246 = arith.subf %230, %245 : vector<16x64xf32>
    %cst_121 = arith.constant 9.99999974E-6 : f32
    %247 = vector.broadcast %cst_121 : f32 to vector<16x1xf32>
    %248 = arith.addf %244, %247 : vector<16x1xf32>
    %249 = math.rsqrt %248 : vector<16x1xf32>
    %250 = vector.broadcast %249 : vector<16x1xf32> to vector<16x64xf32>
    %251 = arith.mulf %246, %250 : vector<16x64xf32>
    %252 = vector.broadcast %232 : vector<1x64xf32> to vector<16x64xf32>
    %253 = arith.mulf %251, %252 : vector<16x64xf32>
    %254 = vector.broadcast %234 : vector<1x64xf32> to vector<16x64xf32>
    %255 = arith.addf %253, %254 : vector<16x64xf32>
    %256 = vector.shape_cast %255 : vector<16x64xf32> to vector<2x8x64xf32>
    %cst_122 = arith.constant dense<0.000000e+00> : vector<2x64xf32>
    %257 = vector.multi_reduction <add>, %256, %cst_122 [1] : vector<2x8x64xf32> to vector<2x64xf32>
    %cst_123 = arith.constant 8.000000e+00 : f32
    %258 = vector.broadcast %cst_123 : f32 to vector<2x64xf32>
    %259 = arith.divf %257, %258 : vector<2x64xf32>
    %c0_124 = arith.constant 0 : index
    %c0_125 = arith.constant 0 : index
    %260 = vector.load %arg18[%c0_124, %c0_125] : memref<1x64xf32, #tpu.memory_space<vmem>>, vector<1x64xf32>
    %cst_126 = arith.constant dense<0.000000e+00> : vector<1x2xf32>
    %261 = tpu.matmul %260, %259, %cst_126 {dimension_numbers = #tpu.dot_dimension_numbers<[1], [1], [0], [0], [0, 0, 1, 0], [], []>} : vector<1x64xf32>, vector<2x64xf32>, vector<1x2xf32> -> vector<1x2xf32>
    %c0_127 = arith.constant 0 : index
    %c0_128 = arith.constant 0 : index
    %262 = vector.load %arg19[%c0_127, %c0_128] : memref<1x1xf32, #tpu.memory_space<vmem>>, vector<1x1xf32>
    %263 = vector.broadcast %262 : vector<1x1xf32> to vector<1x2xf32>
    %264 = arith.addf %261, %263 : vector<1x2xf32>
    %c0_129 = arith.constant 0 : index
    %c0_130 = arith.constant 0 : index
    %265 = vector.load %arg20[%c0_129, %c0_130] : memref<1x2xf32, #tpu.memory_space<vmem>>, vector<1x2xf32>
    tpu.vector_store %arg20[%c0_129, %c0_130], %264 {strides = array<i32>} : memref<1x2xf32, #tpu.memory_space<vmem>>, vector<1x2xf32>,
    return
  }
  func.func @transform_0(%arg0: i32) -> (i32, i32, i32) {
    %c0_i32 = arith.constant 0 : i32
    %c0_i32_0 = arith.constant 0 : i32
    %c0_i32_1 = arith.constant 0 : i32
    %c0_i32_2 = arith.constant 0 : i32
    return %c0_i32, %c0_i32_0, %c0_i32_1 : i32, i32, i32
  }
  func.func @transform_1(%arg0: i32) -> (i32, i32) {
    %c0_i32 = arith.constant 0 : i32
    %c0_i32_0 = arith.constant 0 : i32
    %c0_i32_1 = arith.constant 0 : i32
    return %c0_i32, %c0_i32_0 : i32, i32
  }
  func.func @transform_2(%arg0: i32) -> (i32, i32) {
    %c0_i32 = arith.constant 0 : i32
    %c0_i32_0 = arith.constant 0 : i32
    %c0_i32_1 = arith.constant 0 : i32
    return %c0_i32, %c0_i32_0 : i32, i32
  }
  func.func @transform_3(%arg0: i32) -> (i32, i32) {
    %c0_i32 = arith.constant 0 : i32
    %c0_i32_0 = arith.constant 0 : i32
    %c0_i32_1 = arith.constant 0 : i32
    return %c0_i32, %c0_i32_0 : i32, i32
  }
  func.func @transform_4(%arg0: i32) -> (i32, i32) {
    %c0_i32 = arith.constant 0 : i32
    %c0_i32_0 = arith.constant 0 : i32
    %c0_i32_1 = arith.constant 0 : i32
    return %c0_i32, %c0_i32_0 : i32, i32
  }
  func.func @transform_5(%arg0: i32) -> (i32, i32, i32) {
    %c0_i32 = arith.constant 0 : i32
    %c0_i32_0 = arith.constant 0 : i32
    %c0_i32_1 = arith.constant 0 : i32
    %c0_i32_2 = arith.constant 0 : i32
    return %c0_i32, %c0_i32_0, %c0_i32_1 : i32, i32, i32
  }
  func.func @transform_6(%arg0: i32) -> (i32, i32, i32) {
    %c0_i32 = arith.constant 0 : i32
    %c0_i32_0 = arith.constant 0 : i32
    %c0_i32_1 = arith.constant 0 : i32
    %c0_i32_2 = arith.constant 0 : i32
    return %c0_i32, %c0_i32_0, %c0_i32_1 : i32, i32, i32
  }
  func.func @transform_7(%arg0: i32) -> (i32, i32, i32) {
    %c0_i32 = arith.constant 0 : i32
    %c0_i32_0 = arith.constant 0 : i32
    %c0_i32_1 = arith.constant 0 : i32
    %c0_i32_2 = arith.constant 0 : i32
    return %c0_i32, %c0_i32_0, %c0_i32_1 : i32, i32, i32
  }
  func.func @transform_8(%arg0: i32) -> (i32, i32, i32) {
    %c0_i32 = arith.constant 0 : i32
    %c0_i32_0 = arith.constant 0 : i32
    %c0_i32_1 = arith.constant 0 : i32
    %c0_i32_2 = arith.constant 0 : i32
    return %c0_i32, %c0_i32_0, %c0_i32_1 : i32, i32, i32
  }
  func.func @transform_9(%arg0: i32) -> (i32, i32, i32) {
    %c0_i32 = arith.constant 0 : i32
    %c0_i32_0 = arith.constant 0 : i32
    %c0_i32_1 = arith.constant 0 : i32
    %c0_i32_2 = arith.constant 0 : i32
    return %c0_i32, %c0_i32_0, %c0_i32_1 : i32, i32, i32
  }
  func.func @transform_10(%arg0: i32) -> (i32, i32, i32) {
    %c0_i32 = arith.constant 0 : i32
    %c0_i32_0 = arith.constant 0 : i32
    %c0_i32_1 = arith.constant 0 : i32
    %c0_i32_2 = arith.constant 0 : i32
    return %c0_i32, %c0_i32_0, %c0_i32_1 : i32, i32, i32
  }
  func.func @transform_11(%arg0: i32) -> (i32, i32, i32) {
    %c0_i32 = arith.constant 0 : i32
    %c0_i32_0 = arith.constant 0 : i32
    %c0_i32_1 = arith.constant 0 : i32
    %c0_i32_2 = arith.constant 0 : i32
    return %c0_i32, %c0_i32_0, %c0_i32_1 : i32, i32, i32
  }
  func.func @transform_12(%arg0: i32) -> (i32, i32, i32) {
    %c0_i32 = arith.constant 0 : i32
    %c0_i32_0 = arith.constant 0 : i32
    %c0_i32_1 = arith.constant 0 : i32
    %c0_i32_2 = arith.constant 0 : i32
    return %c0_i32, %c0_i32_0, %c0_i32_1 : i32, i32, i32
  }
  func.func @transform_13(%arg0: i32) -> (i32, i32, i32) {
    %c0_i32 = arith.constant 0 : i32
    %c0_i32_0 = arith.constant 0 : i32
    %c0_i32_1 = arith.constant 0 : i32
    %c0_i32_2 = arith.constant 0 : i32
    return %c0_i32, %c0_i32_0, %c0_i32_1 : i32, i32, i32
  }
  func.func @transform_14(%arg0: i32) -> (i32, i32, i32) {
    %c0_i32 = arith.constant 0 : i32
    %c0_i32_0 = arith.constant 0 : i32
    %c0_i32_1 = arith.constant 0 : i32
    %c0_i32_2 = arith.constant 0 : i32
    return %c0_i32, %c0_i32_0, %c0_i32_1 : i32, i32, i32
  }
  func.func @transform_15(%arg0: i32) -> (i32, i32, i32) {
    %c0_i32 = arith.constant 0 : i32
    %c0_i32_0 = arith.constant 0 : i32
    %c0_i32_1 = arith.constant 0 : i32
    %c0_i32_2 = arith.constant 0 : i32
    return %c0_i32, %c0_i32_0, %c0_i32_1 : i32, i32, i32
  }
  func.func @transform_16(%arg0: i32) -> (i32, i32, i32) {
    %c0_i32 = arith.constant 0 : i32
    %c0_i32_0 = arith.constant 0 : i32
    %c0_i32_1 = arith.constant 0 : i32
    %c0_i32_2 = arith.constant 0 : i32
    return %c0_i32, %c0_i32_0, %c0_i32_1 : i32, i32, i32
  }
  func.func @transform_17(%arg0: i32) -> (i32, i32) {
    %c0_i32 = arith.constant 0 : i32
    %c0_i32_0 = arith.constant 0 : i32
    %c0_i32_1 = arith.constant 0 : i32
    return %c0_i32, %c0_i32_0 : i32, i32
  }
  func.func @transform_18(%arg0: i32) -> (i32, i32) {
    %c0_i32 = arith.constant 0 : i32
    %c0_i32_0 = arith.constant 0 : i32
    %c0_i32_1 = arith.constant 0 : i32
    return %c0_i32, %c0_i32_0 : i32, i32
  }
  func.func @transform_19(%arg0: i32) -> (i32, i32) {
    %c0_i32 = arith.constant 0 : i32
    %c0_i32_0 = arith.constant 0 : i32
    %c0_i32_1 = arith.constant 0 : i32
    return %c0_i32, %c0_i32_0 : i32, i32
  }
}

</mosaic_0001>

<llo_original>
// kernel: tpu_custom_call.1
$region0: #{tpu_custom_call.1}
  #allocation0 [shape = 'u32[]', space=smem, size = 0x4, offset = 0x4, fixed_abs, tag = 'smem constant byte address 0x4 - core index']
  #allocation1 [shape = 'u32[144,128]{1,0:T(1,128)}', space=vmem, size = 0x12000, scoped, tag = 'internal scratch']
  #allocation2 [shape = 'f32[1,1]{1,0:T(1,128)S(1)}', space=vmem, size = 0x200, scoped, tag = 'scoped memory for tpu_custom_call.1']
  %s0 = inlined_call_operand.vmem [shape: f32[2,8,1], index: 0, kind: input, shape index: {}]
  %s1 = inlined_call_operand.vmem [shape: f32[16,64], index: 1, kind: input, shape index: {}]
  %s2 = inlined_call_operand.vmem [shape: f32[16,16], index: 2, kind: input, shape index: {}]
  %s3 = inlined_call_operand.vmem [shape: f32[1,64], index: 3, kind: input, shape index: {}]
  %s4 = inlined_call_operand.vmem [shape: f32[1,64], index: 4, kind: input, shape index: {}]
  %s5 = inlined_call_operand.vmem [shape: f32[2,64,192], index: 5, kind: input, shape index: {}]
  %s6 = inlined_call_operand.vmem [shape: f32[2,1,192], index: 6, kind: input, shape index: {}]
  %s7 = inlined_call_operand.vmem [shape: f32[2,64,64], index: 7, kind: input, shape index: {}]
  %s8 = inlined_call_operand.vmem [shape: f32[2,1,64], index: 8, kind: input, shape index: {}]
  %s9 = inlined_call_operand.vmem [shape: f32[2,64,256], index: 9, kind: input, shape index: {}]
  %s10 = inlined_call_operand.vmem [shape: f32[2,1,256], index: 10, kind: input, shape index: {}]
  %s11 = inlined_call_operand.vmem [shape: f32[2,256,64], index: 11, kind: input, shape index: {}]
  %s12 = inlined_call_operand.vmem [shape: f32[2,1,64], index: 12, kind: input, shape index: {}]
  %s13 = inlined_call_operand.vmem [shape: f32[2,1,64], index: 13, kind: input, shape index: {}]
  %s14 = inlined_call_operand.vmem [shape: f32[2,1,64], index: 14, kind: input, shape index: {}]
  %s15 = inlined_call_operand.vmem [shape: f32[2,1,64], index: 15, kind: input, shape index: {}]
  %s16 = inlined_call_operand.vmem [shape: f32[2,1,64], index: 16, kind: input, shape index: {}]
  %s17 = inlined_call_operand.vmem [shape: f32[1,64], index: 17, kind: input, shape index: {}]
  %s18 = inlined_call_operand.<no memory space> [shape: f32[1,1], index: 18, kind: input, shape index: {}]
  %s19 = inlined_call_operand.hbm [shape: f32[1,2], index: 19, kind: output, shape index: {}]
  %s20 = sld [smem:[#allocation0]]
  $region86: #{tpu_custom_call.1} parent=0
    _
  %s22 = ssub.s32 1, %s20
  %s23 = scalar_select 0, %s22, %s20
  %v24 = vstv %s18
  %25 = vst [vmem:[#allocation2] sm:$0x1] %v24
  $region1: #{tpu_custom_call.1} parent=0
    #allocation3 [shape = 'u8[512]{0}', space=vmem, size = 0x400, scoped, tag = 'output window, operand 0, single buffered']
    #allocation4 [shape = 's32[1]{0}', space=sflag, size = 0x4, scoped, tag = 'scoped memory for tpu_custom_call.1']
    %26 = vsyncpa [#allocation4], 0
    // Predicated region
    $region2: #{tpu_custom_call.1} parent=1 // pred_check
      _
    $region3: #{tpu_custom_call.1} parent=1 // pred_check_branch
      %28 = sbr.rel (0) target = $region5
    $region4: #{tpu_custom_call.1} parent=1 // pred_region
      _
    $region5: #{tpu_custom_call.1} parent=1 // pred_fallthru
      _
    // Predicated region
    $region6: #{tpu_custom_call.1} parent=1 // pred_check
      _
    $region7: #{tpu_custom_call.1} parent=1 // pred_check_branch
      %30 = sbr.rel (0) target = $region9
    $region8: #{tpu_custom_call.1} parent=1 // pred_region
      _
    $region9: #{tpu_custom_call.1} parent=1 // pred_fallthru
      _
    // Predicated region
    $region10: #{tpu_custom_call.1} parent=1 // pred_check
      _
    $region11: #{tpu_custom_call.1} parent=1 // pred_check_branch
      %32 = sbr.rel (0) target = $region13
    $region12: #{tpu_custom_call.1} parent=1 // pred_region
      _
    $region13: #{tpu_custom_call.1} parent=1 // pred_fallthru
      _
    // Predicated region
    $region14: #{tpu_custom_call.1} parent=1 // pred_check
      _
    $region15: #{tpu_custom_call.1} parent=1 // pred_check_branch
      %34 = sbr.rel (0) target = $region17
    $region16: #{tpu_custom_call.1} parent=1 // pred_region
      _
    $region17: #{tpu_custom_call.1} parent=1 // pred_fallthru
      _
    // Predicated region
    $region18: #{tpu_custom_call.1} parent=1 // pred_check
      _
    $region19: #{tpu_custom_call.1} parent=1 // pred_check_branch
      %36 = sbr.rel (0) target = $region21
    $region20: #{tpu_custom_call.1} parent=1 // pred_region
      _
    $region21: #{tpu_custom_call.1} parent=1 // pred_fallthru
      _
    // Predicated region
    $region22: #{tpu_custom_call.1} parent=1 // pred_check
      _
    $region23: #{tpu_custom_call.1} parent=1 // pred_check_branch
      %38 = sbr.rel (0) target = $region25
    $region24: #{tpu_custom_call.1} parent=1 // pred_region
      _
    $region25: #{tpu_custom_call.1} parent=1 // pred_fallthru
      _
    // Predicated region
    $region26: #{tpu_custom_call.1} parent=1 // pred_check
      _
    $region27: #{tpu_custom_call.1} parent=1 // pred_check_branch
      %40 = sbr.rel (0) target = $region29
    $region28: #{tpu_custom_call.1} parent=1 // pred_region
      _
    $region29: #{tpu_custom_call.1} parent=1 // pred_fallthru
      _
    // Predicated region
    $region30: #{tpu_custom_call.1} parent=1 // pred_check
      _
    $region31: #{tpu_custom_call.1} parent=1 // pred_check_branch
      %42 = sbr.rel (0) target = $region33
    $region32: #{tpu_custom_call.1} parent=1 // pred_region
      _
    $region33: #{tpu_custom_call.1} parent=1 // pred_fallthru
      _
    // Predicated region
    $region34: #{tpu_custom_call.1} parent=1 // pred_check
      _
    $region35: #{tpu_custom_call.1} parent=1 // pred_check_branch
      %44 = sbr.rel (0) target = $region37
    $region36: #{tpu_custom_call.1} parent=1 // pred_region
      _
    $region37: #{tpu_custom_call.1} parent=1 // pred_fallthru
      _
    // Predicated region
    $region38: #{tpu_custom_call.1} parent=1 // pred_check
      _
    $region39: #{tpu_custom_call.1} parent=1 // pred_check_branch
      %46 = sbr.rel (0) target = $region41
    $region40: #{tpu_custom_call.1} parent=1 // pred_region
      _
    $region41: #{tpu_custom_call.1} parent=1 // pred_fallthru
      _
    // Predicated region
    $region42: #{tpu_custom_call.1} parent=1 // pred_check
      _
    $region43: #{tpu_custom_call.1} parent=1 // pred_check_branch
      %48 = sbr.rel (0) target = $region45
    $region44: #{tpu_custom_call.1} parent=1 // pred_region
      _
    $region45: #{tpu_custom_call.1} parent=1 // pred_fallthru
      _
    // Predicated region
    $region46: #{tpu_custom_call.1} parent=1 // pred_check
      _
    $region47: #{tpu_custom_call.1} parent=1 // pred_check_branch
      %50 = sbr.rel (0) target = $region49
    $region48: #{tpu_custom_call.1} parent=1 // pred_region
      _
    $region49: #{tpu_custom_call.1} parent=1 // pred_fallthru
      _
    // Predicated region
    $region50: #{tpu_custom_call.1} parent=1 // pred_check
      _
    $region51: #{tpu_custom_call.1} parent=1 // pred_check_branch
      %52 = sbr.rel (0) target = $region53
    $region52: #{tpu_custom_call.1} parent=1 // pred_region
      _
    $region53: #{tpu_custom_call.1} parent=1 // pred_fallthru
      _
    // Predicated region
    $region54: #{tpu_custom_call.1} parent=1 // pred_check
      _
    $region55: #{tpu_custom_call.1} parent=1 // pred_check_branch
      %54 = sbr.rel (0) target = $region57
    $region56: #{tpu_custom_call.1} parent=1 // pred_region
      _
    $region57: #{tpu_custom_call.1} parent=1 // pred_fallthru
      _
    // Predicated region
    $region58: #{tpu_custom_call.1} parent=1 // pred_check
      _
    $region59: #{tpu_custom_call.1} parent=1 // pred_check_branch
      %56 = sbr.rel (0) target = $region61
    $region60: #{tpu_custom_call.1} parent=1 // pred_region
      _
    $region61: #{tpu_custom_call.1} parent=1 // pred_fallthru
      _
    // Predicated region
    $region62: #{tpu_custom_call.1} parent=1 // pred_check
      _
    $region63: #{tpu_custom_call.1} parent=1 // pred_check_branch
      %58 = sbr.rel (0) target = $region65
    $region64: #{tpu_custom_call.1} parent=1 // pred_region
      _
    $region65: #{tpu_custom_call.1} parent=1 // pred_fallthru
      _
    // Predicated region
    $region66: #{tpu_custom_call.1} parent=1 // pred_check
      _
    $region67: #{tpu_custom_call.1} parent=1 // pred_check_branch
      %60 = sbr.rel (0) target = $region69
    $region68: #{tpu_custom_call.1} parent=1 // pred_region
      _
    $region69: #{tpu_custom_call.1} parent=1 // pred_fallthru
      _
    // Predicated region
    $region70: #{tpu_custom_call.1} parent=1 // pred_check
      _
    $region71: #{tpu_custom_call.1} parent=1 // pred_check_branch
      %62 = sbr.rel (0) target = $region73
    $region72: #{tpu_custom_call.1} parent=1 // pred_region
      _
    $region73: #{tpu_custom_call.1} parent=1 // pred_fallthru
      _
    // Predicated region
    $region74: #{tpu_custom_call.1} parent=1 // pred_check
      _
    $region75: #{tpu_custom_call.1} parent=1 // pred_check_branch
      %64 = sbr.rel (0) target = $region77
    $region76: #{tpu_custom_call.1} parent=1 // pred_region
      _
    $region77: #{tpu_custom_call.1} parent=1 // pred_fallthru
      _
    %v65 = vld [vmem:[%s0] sm:$0xff]
    %v66 = vld [vmem:[%s0 + $0x8] sm:$0xff]
    %v67 = vld [vmem:[%s3] sm:$0x1]
    %69 = vset.pattern.permute.xlu0 0
    %70 = vperm.xlu0 %69, %v65
    %v71 = vpop.permute.xlu0 %70
    %74 = vset.pattern.permute.xlu0 0
    %75 = vperm.xlu0 %74, %v66
    %v76 = vpop.permute.xlu0 %75
    %v79 = vlaneseq
    %v80 = vshrl.u32 %v79, 7
    %v81 = vsub.s32 0, %v80
    %v82 = vrot.slane %v67, %v81
    %v84 = vmul.f32 %v71, %v82
    %v85 = vmul.f32 %v76, %v82
    %v86 = vld [vmem:[%s4] sm:$0x1]
    %v88 = vlaneseq
    %v89 = vshrl.u32 %v88, 7
    %v90 = vsub.s32 0, %v89
    %v91 = vrot.slane %v86, %v90
    %v93 = vadd.f32 %v84, %v91
    %v94 = vadd.f32 %v85, %v91
    %v95 = vld [vmem:[%s1] sm:$0xff]
    %v96 = vld [vmem:[%s1 + $0x8] sm:$0xff]
    %v97 = vadd.f32 %v93, %v95
    %v98 = vadd.f32 %v94, %v96
    %v99 = vld [vmem:[%s2] sm:$0xff]
    %v100 = vld [vmem:[%s2 + $0x8] sm:$0xff]
    %v101 = vld [vmem:[%s5] sm:$0xff]
    %v102 = vld [vmem:[%s5 + $0x8] sm:$0xff]
    %v103 = vld [vmem:[%s5 + $0x10] sm:$0xff]
    %v104 = vld [vmem:[%s5 + $0x18] sm:$0xff]
    %v105 = vld [vmem:[%s5 + $0x20] sm:$0xff]
    %v106 = vld [vmem:[%s5 + $0x28] sm:$0xff]
    %v107 = vld [vmem:[%s5 + $0x30] sm:$0xff]
    %v108 = vld [vmem:[%s5 + $0x38] sm:$0xff]
    %v109 = vld [vmem:[%s5 + $0x40] sm:$0xff]
    %v110 = vld [vmem:[%s5 + $0x48] sm:$0xff]
    %v111 = vld [vmem:[%s5 + $0x50] sm:$0xff]
    %v112 = vld [vmem:[%s5 + $0x58] sm:$0xff]
    %v113 = vld [vmem:[%s5 + $0x60] sm:$0xff]
    %v114 = vld [vmem:[%s5 + $0x68] sm:$0xff]
    %v115 = vld [vmem:[%s5 + $0x70] sm:$0xff]
    %v116 = vld [vmem:[%s5 + $0x78] sm:$0xff]
    %v117 = vld [vmem:[%s6] sm:$0x3]
    %v119 = vlaneseq
    %v120 = vshrl.u32 %v119, 7
    %v121 = vsub.s32 0, %v120
    %v122 = vrot.slane %v117, %v121
    %v123 = vlaneseq
    %v124 = vshrl.u32 %v123, 7
    %v125 = vsub.s32 1, %v124
    %v126 = vrot.slane %v117, %v125
    %vm129 = vcmask 523264
    %v131 = vsel %vm129, %v97, 0
    %v134 = vsel %vm129, %v98, 0
    %136 = vmatprep.subr.mxu0 %v102
    %137 = vmatpush1.msra.mxu0 %v101
    %138 = vmatprep.subr.mxu0 %v104
    %139 = vmatpush1.msra.mxu0 %v103
    %140 = vmatprep.subr.mxu0 %v106
    %141 = vmatpush1.msra.mxu0 %v105
    %142 = vmatprep.subr.mxu0 %v108
    %143 = vmatpush1.msra.mxu0 %v107
    %144 = vmatprep.subr.mxu0 %v110
    %145 = vmatpush1.msra.mxu0 %v109
    %146 = vmatprep.subr.mxu0 %v112
    %147 = vmatpush1.msra.mxu0 %v111
    %148 = vmatprep.subr.mxu0 %v114
    %149 = vmatpush1.msra.mxu0 %v113
    %150 = vmatprep.subr.mxu0 %v116
    %151 = vmatpush1.msra.mxu0 %v115
    %152 = vmatprep.subr.mxu0 0.0
    %153 = vmatpush1.msra.mxu0 0.0
    %154 = vmatprep.subr.mxu0 0.0
    %155 = vmatpush1.msra.mxu0 0.0
    %156 = vmatprep.subr.mxu0 0.0
    %157 = vmatpush1.msra.mxu0 0.0
    %158 = vmatprep.subr.mxu0 0.0
    %159 = vmatpush1.msra.mxu0 0.0
    %160 = vmatprep.subr.mxu0 0.0
    %161 = vmatpush1.msra.mxu0 0.0
    %162 = vmatprep.subr.mxu0 0.0
    %163 = vmatpush1.msra.mxu0 0.0
    %164 = vmatprep.subr.mxu0 0.0
    %165 = vmatpush1.msra.mxu0 0.0
    %166 = vmatprep.subr.mxu0 0.0
    %167 = vmatpush1.msra.mxu0 0.0
    %168 = vmatprep.subr.mxu0 0.0
    %169 = vmatpush1.msra.mxu0 0.0
    %170 = vmatprep.subr.mxu0 0.0
    %171 = vmatpush1.msra.mxu0 0.0
    %172 = vmatprep.subr.mxu0 0.0
    %173 = vmatpush1.msra.mxu0 0.0
    %174 = vmatprep.subr.mxu0 0.0
    %175 = vmatpush1.msra.mxu0 0.0
    %176 = vmatprep.subr.mxu0 0.0
    %177 = vmatpush1.msra.mxu0 0.0
    %178 = vmatprep.subr.mxu0 0.0
    %179 = vmatpush1.msra.mxu0 0.0
    %180 = vmatprep.subr.mxu0 0.0
    %181 = vmatpush1.msra.mxu0 0.0
    %182 = vmatprep.subr.mxu0 0.0
    %183 = vmatpush1.msra.mxu0 0.0
    %184 = vmatprep.subr.mxu0 0.0
    %185 = vmatpush1.msra.mxu0 0.0
    %186 = vmatprep.subr.mxu0 0.0
    %187 = vmatpush1.msra.mxu0 0.0
    %188 = vmatprep.subr.mxu0 0.0
    %189 = vmatpush1.msra.mxu0 0.0
    %190 = vmatprep.subr.mxu0 0.0
    %191 = vmatpush1.msra.mxu0 0.0
    %192 = vmatprep.subr.mxu0 0.0
    %193 = vmatpush1.msra.mxu0 0.0
    %194 = vmatprep.subr.mxu0 0.0
    %195 = vmatpush1.msra.mxu0 0.0
    %196 = vmatprep.subr.mxu0 0.0
    %197 = vmatpush1.msra.mxu0 0.0
    %198 = vmatprep.subr.mxu0 0.0
    %199 = vmatpush1.msra.mxu0 0.0
    %200 = vmatprep.mubr.f32.mxu0 0.0
    %201 = vmatmul.mubr.f32.gmra.mrb[0].mxu0 %v131
    %v202 = vpop.f32.mrb[0].mxu0
    %v203 = vadd.f32 %v122, %v202
    %v204 = vpop.f32.mrb[0].mxu0
    %v205 = vadd.f32 %v126, %v204
    %206 = vmatprep.mubr.f32.mxu0 0.0
    %207 = vmatmul.mubr.f32.gmra.mrb[0].mxu0 %v134
    %v208 = vpop.f32.mrb[0].mxu0
    %v209 = vadd.f32 %v122, %v208
    %v210 = vpop.f32.mrb[0].mxu0
    %v211 = vadd.f32 %v126, %v210
    %212 = vdwg.mxu0
    %215 = vrot.lane.b32.xlu0 %v203, 64
    %v216 = vpop.permute.xlu0 %215
    %217 = vrot.lane.b32.xlu0 %v209, 64
    %v218 = vpop.permute.xlu0 %217
    %vm219 = vcmask 261120
    %v220 = vsel %vm219, %v203, 0
    %v222 = vsel %vm219, %v209, 0
    %v224 = vsel %vm219, %v216, 0
    %v226 = vsel %vm219, %v218, 0
    %228 = vmatprep.subr.mxu0 0.0
    %229 = vmatpush1.xpose.msra.mxu0 %v224
    %230 = vmatprep.subr.mxu0 0.0
    %231 = vmatpush1.xpose.msra.mxu0 %v226
    %232 = vmatprep.subr.mxu0 0.0
    %233 = vmatpush1.xpose.msra.mxu0 0.0
    %234 = vmatprep.subr.mxu0 0.0
    %235 = vmatpush1.xpose.msra.mxu0 0.0
    %236 = vmatprep.subr.mxu0 0.0
    %237 = vmatpush1.xpose.msra.mxu0 0.0
    %238 = vmatprep.subr.mxu0 0.0
    %239 = vmatpush1.xpose.msra.mxu0 0.0
    %240 = vmatprep.subr.mxu0 0.0
    %241 = vmatpush1.xpose.msra.mxu0 0.0
    %242 = vmatprep.subr.mxu0 0.0
    %243 = vmatpush1.xpose.msra.mxu0 0.0
    %244 = vmatprep.subr.mxu0 0.0
    %245 = vmatpush1.xpose.msra.mxu0 0.0
    %246 = vmatprep.subr.mxu0 0.0
    %247 = vmatpush1.xpose.msra.mxu0 0.0
    %248 = vmatprep.subr.mxu0 0.0
    %249 = vmatpush1.xpose.msra.mxu0 0.0
    %250 = vmatprep.subr.mxu0 0.0
    %251 = vmatpush1.xpose.msra.mxu0 0.0
    %252 = vmatprep.subr.mxu0 0.0
    %253 = vmatpush1.xpose.msra.mxu0 0.0
    %254 = vmatprep.subr.mxu0 0.0
    %255 = vmatpush1.xpose.msra.mxu0 0.0
    %256 = vmatprep.subr.mxu0 0.0
    %257 = vmatpush1.xpose.msra.mxu0 0.0
    %258 = vmatprep.subr.mxu0 0.0
    %259 = vmatpush1.xpose.msra.mxu0 0.0
    %260 = vmatprep.subr.mxu0 0.0
    %261 = vmatpush1.xpose.msra.mxu0 0.0
    %262 = vmatprep.subr.mxu0 0.0
    %263 = vmatpush1.xpose.msra.mxu0 0.0
    %264 = vmatprep.subr.mxu0 0.0
    %265 = vmatpush1.xpose.msra.mxu0 0.0
    %266 = vmatprep.subr.mxu0 0.0
    %267 = vmatpush1.xpose.msra.mxu0 0.0
    %268 = vmatprep.subr.mxu0 0.0
    %269 = vmatpush1.xpose.msra.mxu0 0.0
    %270 = vmatprep.subr.mxu0 0.0
    %271 = vmatpush1.xpose.msra.mxu0 0.0
    %272 = vmatprep.subr.mxu0 0.0
    %273 = vmatpush1.xpose.msra.mxu0 0.0
    %274 = vmatprep.subr.mxu0 0.0
    %275 = vmatpush1.xpose.msra.mxu0 0.0
    %276 = vmatprep.subr.mxu0 0.0
    %277 = vmatpush1.xpose.msra.mxu0 0.0
    %278 = vmatprep.subr.mxu0 0.0
    %279 = vmatpush1.xpose.msra.mxu0 0.0
    %280 = vmatprep.subr.mxu0 0.0
    %281 = vmatpush1.xpose.msra.mxu0 0.0
    %282 = vmatprep.subr.mxu0 0.0
    %283 = vmatpush1.xpose.msra.mxu0 0.0
    %284 = vmatprep.subr.mxu0 0.0
    %285 = vmatpush1.xpose.msra.mxu0 0.0
    %286 = vmatprep.subr.mxu0 0.0
    %287 = vmatpush1.xpose.msra.mxu0 0.0
    %288 = vmatprep.subr.mxu0 0.0
    %289 = vmatpush1.xpose.msra.mxu0 0.0
    %290 = vmatprep.subr.mxu0 0.0
    %291 = vmatpush1.xpose.msra.mxu0 0.0
    %292 = vmatprep.mubr.f32.mxu0 0.0
    %293 = vmatmul.mubr.f32.gmra.mrb[0].mxu0 %v220
    %v294 = vpop.f32.mrb[0].mxu0
    %v295 = vadd.f32 0.0, %v294
    %v296 = vpop.f32.mrb[0].mxu0
    %297 = vmatprep.mubr.f32.mxu0 0.0
    %298 = vmatmul.mubr.f32.gmra.mrb[0].mxu0 %v222
    %v299 = vpop.f32.mrb[0].mxu0
    %v300 = vadd.f32 0.0, %v299
    %v301 = vpop.f32.mrb[0].mxu0
    %302 = vdwg.mxu0
    %v303 = vmul.f32 %v295, 0.17677669
    %v304 = vmul.f32 %v300, 0.17677669
    %v305 = vadd.f32 %v303, %v99
    %v306 = vadd.f32 %v304, %v100
    %vm307 = vcmask 130048
    %v308 = vsel %vm307, %v305, -inf
    %309 = vmax.xlane.f32.xlu0 %v308
    %v310 = vpop.xlane.xlu0 %309
    %v311 = vsel %vm307, %v306, -inf
    %312 = vmax.xlane.f32.xlu0 %v311
    %v313 = vpop.xlane.xlu0 %312
    %v314 = vsub.f32 %v305, %v310
    %v315 = vsub.f32 %v306, %v313
    %v316 = vmul.f32 %v314, 1.442695
    %v317 = vpow.pop %v316
    %v318 = vmul.f32 %v315, 1.442695
    %v319 = vpow.pop %v318
    %v320 = vsel %vm307, %v317, 0.0
    %321 = vadd.xlane.f32.xlu0 %v320
    %v322 = vpop.xlane.xlu0 %321
    %v323 = vsel %vm307, %v319, 0.0
    %324 = vadd.xlane.f32.xlu0 %v323
    %v325 = vpop.xlane.xlu0 %324
    %v326 = vrcp.pop %v322
    %v327 = vrcp.pop %v325
    %v328 = vmul.f32 %v317, %v326
    %v329 = vmul.f32 %v319, %v327
    %v331 = vsel %vm307, %v328, 0
    %v334 = vsel %vm307, %v329, 0
    %336 = vmatprep.subr.mxu0 0.0
    %337 = vmatpush1.msra.mxu0 %v205
    %338 = vmatprep.subr.mxu0 0.0
    %339 = vmatpush1.msra.mxu0 %v211
    %340 = vmatprep.subr.mxu0 0.0
    %341 = vmatpush1.msra.mxu0 0.0
    %342 = vmatprep.subr.mxu0 0.0
    %343 = vmatpush1.msra.mxu0 0.0
    %344 = vmatprep.subr.mxu0 0.0
    %345 = vmatpush1.msra.mxu0 0.0
    %346 = vmatprep.subr.mxu0 0.0
    %347 = vmatpush1.msra.mxu0 0.0
    %348 = vmatprep.subr.mxu0 0.0
    %349 = vmatpush1.msra.mxu0 0.0
    %350 = vmatprep.subr.mxu0 0.0
    %351 = vmatpush1.msra.mxu0 0.0
    %352 = vmatprep.subr.mxu0 0.0
    %353 = vmatpush1.msra.mxu0 0.0
    %354 = vmatprep.subr.mxu0 0.0
    %355 = vmatpush1.msra.mxu0 0.0
    %356 = vmatprep.subr.mxu0 0.0
    %357 = vmatpush1.msra.mxu0 0.0
    %358 = vmatprep.subr.mxu0 0.0
    %359 = vmatpush1.msra.mxu0 0.0
    %360 = vmatprep.subr.mxu0 0.0
    %361 = vmatpush1.msra.mxu0 0.0
    %362 = vmatprep.subr.mxu0 0.0
    %363 = vmatpush1.msra.mxu0 0.0
    %364 = vmatprep.subr.mxu0 0.0
    %365 = vmatpush1.msra.mxu0 0.0
    %366 = vmatprep.subr.mxu0 0.0
    %367 = vmatpush1.msra.mxu0 0.0
    %368 = vmatprep.subr.mxu0 0.0
    %369 = vmatpush1.msra.mxu0 0.0
    %370 = vmatprep.subr.mxu0 0.0
    %371 = vmatpush1.msra.mxu0 0.0
    %372 = vmatprep.subr.mxu0 0.0
    %373 = vmatpush1.msra.mxu0 0.0
    %374 = vmatprep.subr.mxu0 0.0
    %375 = vmatpush1.msra.mxu0 0.0
    %376 = vmatprep.subr.mxu0 0.0
    %377 = vmatpush1.msra.mxu0 0.0
    %378 = vmatprep.subr.mxu0 0.0
    %379 = vmatpush1.msra.mxu0 0.0
    %380 = vmatprep.subr.mxu0 0.0
    %381 = vmatpush1.msra.mxu0 0.0
    %382 = vmatprep.subr.mxu0 0.0
    %383 = vmatpush1.msra.mxu0 0.0
    %384 = vmatprep.subr.mxu0 0.0
    %385 = vmatpush1.msra.mxu0 0.0
    %386 = vmatprep.subr.mxu0 0.0
    %387 = vmatpush1.msra.mxu0 0.0
    %388 = vmatprep.subr.mxu0 0.0
    %389 = vmatpush1.msra.mxu0 0.0
    %390 = vmatprep.subr.mxu0 0.0
    %391 = vmatpush1.msra.mxu0 0.0
    %392 = vmatprep.subr.mxu0 0.0
    %393 = vmatpush1.msra.mxu0 0.0
    %394 = vmatprep.subr.mxu0 0.0
    %395 = vmatpush1.msra.mxu0 0.0
    %396 = vmatprep.subr.mxu0 0.0
    %397 = vmatpush1.msra.mxu0 0.0
    %398 = vmatprep.subr.mxu0 0.0
    %399 = vmatpush1.msra.mxu0 0.0
    %400 = vmatprep.mubr.f32.mxu0 0.0
    %401 = vmatmul.mubr.f32.gmra.mrb[0].mxu0 %v331
    %v402 = vpop.f32.mrb[0].mxu0
    %v403 = vadd.f32 0.0, %v402
    %v404 = vpop.f32.mrb[0].mxu0
    %405 = vmatprep.mubr.f32.mxu0 0.0
    %406 = vmatmul.mubr.f32.gmra.mrb[0].mxu0 %v334
    %v407 = vpop.f32.mrb[0].mxu0
    %v408 = vadd.f32 0.0, %v407
    %v409 = vpop.f32.mrb[0].mxu0
    %410 = vdwg.mxu0
    %411 = vrot.lane.b32.xlu0 %v203, 96
    %v412 = vpop.permute.xlu0 %411
    %413 = vrot.lane.b32.xlu0 %v209, 96
    %v414 = vpop.permute.xlu0 %413
    %415 = vrot.lane.b32.xlu0 %v203, 32
    %v416 = vpop.permute.xlu0 %415
    %417 = vrot.lane.b32.xlu0 %v209, 32
    %v418 = vpop.permute.xlu0 %417
    %v419 = vsel %vm219, %v412, 0
    %v421 = vsel %vm219, %v414, 0
    %v423 = vsel %vm219, %v416, 0
    %v425 = vsel %vm219, %v418, 0
    %427 = vmatprep.subr.mxu0 0.0
    %428 = vmatpush1.xpose.msra.mxu0 %v423
    %429 = vmatprep.subr.mxu0 0.0
    %430 = vmatpush1.xpose.msra.mxu0 %v425
    %431 = vmatprep.subr.mxu0 0.0
    %432 = vmatpush1.xpose.msra.mxu0 0.0
    %433 = vmatprep.subr.mxu0 0.0
    %434 = vmatpush1.xpose.msra.mxu0 0.0
    %435 = vmatprep.subr.mxu0 0.0
    %436 = vmatpush1.xpose.msra.mxu0 0.0
    %437 = vmatprep.subr.mxu0 0.0
    %438 = vmatpush1.xpose.msra.mxu0 0.0
    %439 = vmatprep.subr.mxu0 0.0
    %440 = vmatpush1.xpose.msra.mxu0 0.0
    %441 = vmatprep.subr.mxu0 0.0
    %442 = vmatpush1.xpose.msra.mxu0 0.0
    %443 = vmatprep.subr.mxu0 0.0
    %444 = vmatpush1.xpose.msra.mxu0 0.0
    %445 = vmatprep.subr.mxu0 0.0
    %446 = vmatpush1.xpose.msra.mxu0 0.0
    %447 = vmatprep.subr.mxu0 0.0
    %448 = vmatpush1.xpose.msra.mxu0 0.0
    %449 = vmatprep.subr.mxu0 0.0
    %450 = vmatpush1.xpose.msra.mxu0 0.0
    %451 = vmatprep.subr.mxu0 0.0
    %452 = vmatpush1.xpose.msra.mxu0 0.0
    %453 = vmatprep.subr.mxu0 0.0
    %454 = vmatpush1.xpose.msra.mxu0 0.0
    %455 = vmatprep.subr.mxu0 0.0
    %456 = vmatpush1.xpose.msra.mxu0 0.0
    %457 = vmatprep.subr.mxu0 0.0
    %458 = vmatpush1.xpose.msra.mxu0 0.0
    %459 = vmatprep.subr.mxu0 0.0
    %460 = vmatpush1.xpose.msra.mxu0 0.0
    %461 = vmatprep.subr.mxu0 0.0
    %462 = vmatpush1.xpose.msra.mxu0 0.0
    %463 = vmatprep.subr.mxu0 0.0
    %464 = vmatpush1.xpose.msra.mxu0 0.0
    %465 = vmatprep.subr.mxu0 0.0
    %466 = vmatpush1.xpose.msra.mxu0 0.0
    %467 = vmatprep.subr.mxu0 0.0
    %468 = vmatpush1.xpose.msra.mxu0 0.0
    %469 = vmatprep.subr.mxu0 0.0
    %470 = vmatpush1.xpose.msra.mxu0 0.0
    %471 = vmatprep.subr.mxu0 0.0
    %472 = vmatpush1.xpose.msra.mxu0 0.0
    %473 = vmatprep.subr.mxu0 0.0
    %474 = vmatpush1.xpose.msra.mxu0 0.0
    %475 = vmatprep.subr.mxu0 0.0
    %476 = vmatpush1.xpose.msra.mxu0 0.0
    %477 = vmatprep.subr.mxu0 0.0
    %478 = vmatpush1.xpose.msra.mxu0 0.0
    %479 = vmatprep.subr.mxu0 0.0
    %480 = vmatpush1.xpose.msra.mxu0 0.0
    %481 = vmatprep.subr.mxu0 0.0
    %482 = vmatpush1.xpose.msra.mxu0 0.0
    %483 = vmatprep.subr.mxu0 0.0
    %484 = vmatpush1.xpose.msra.mxu0 0.0
    %485 = vmatprep.subr.mxu0 0.0
    %486 = vmatpush1.xpose.msra.mxu0 0.0
    %487 = vmatprep.subr.mxu0 0.0
    %488 = vmatpush1.xpose.msra.mxu0 0.0
    %489 = vmatprep.subr.mxu0 0.0
    %490 = vmatpush1.xpose.msra.mxu0 0.0
    %491 = vmatprep.mubr.f32.mxu0 0.0
    %492 = vmatmul.mubr.f32.gmra.mrb[0].mxu0 %v419
    %v493 = vpop.f32.mrb[0].mxu0
    %v494 = vadd.f32 0.0, %v493
    %v495 = vpop.f32.mrb[0].mxu0
    %496 = vmatprep.mubr.f32.mxu0 0.0
    %497 = vmatmul.mubr.f32.gmra.mrb[0].mxu0 %v421
    %v498 = vpop.f32.mrb[0].mxu0
    %v499 = vadd.f32 0.0, %v498
    %v500 = vpop.f32.mrb[0].mxu0
    %501 = vdwg.mxu0
    %v502 = vmul.f32 %v494, 0.17677669
    %v503 = vmul.f32 %v499, 0.17677669
    %v504 = vadd.f32 %v502, %v99
    %v505 = vadd.f32 %v503, %v100
    %v506 = vsel %vm307, %v504, -inf
    %507 = vmax.xlane.f32.xlu0 %v506
    %v508 = vpop.xlane.xlu0 %507
    %v509 = vsel %vm307, %v505, -inf
    %510 = vmax.xlane.f32.xlu0 %v509
    %v511 = vpop.xlane.xlu0 %510
    %v512 = vsub.f32 %v504, %v508
    %v513 = vsub.f32 %v505, %v511
    %v514 = vmul.f32 %v512, 1.442695
    %v515 = vpow.pop %v514
    %v516 = vmul.f32 %v513, 1.442695
    %v517 = vpow.pop %v516
    %v518 = vsel %vm307, %v515, 0.0
    %519 = vadd.xlane.f32.xlu0 %v518
    %v520 = vpop.xlane.xlu0 %519
    %v521 = vsel %vm307, %v517, 0.0
    %522 = vadd.xlane.f32.xlu0 %v521
    %v523 = vpop.xlane.xlu0 %522
    %v524 = vrcp.pop %v520
    %v525 = vrcp.pop %v523
    %v526 = vmul.f32 %v515, %v524
    %v527 = vmul.f32 %v517, %v525
    %530 = vrot.lane.b32.xlu0 %v205, 96
    %v531 = vpop.permute.xlu0 %530
    %532 = vrot.lane.b32.xlu0 %v211, 96
    %v533 = vpop.permute.xlu0 %532
    %v537 = vsel %vm307, %v526, 0
    %v540 = vsel %vm307, %v527, 0
    %542 = vmatprep.subr.mxu0 0.0
    %543 = vmatpush1.msra.mxu0 %v531
    %544 = vmatprep.subr.mxu0 0.0
    %545 = vmatpush1.msra.mxu0 %v533
    %546 = vmatprep.subr.mxu0 0.0
    %547 = vmatpush1.msra.mxu0 0.0
    %548 = vmatprep.subr.mxu0 0.0
    %549 = vmatpush1.msra.mxu0 0.0
    %550 = vmatprep.subr.mxu0 0.0
    %551 = vmatpush1.msra.mxu0 0.0
    %552 = vmatprep.subr.mxu0 0.0
    %553 = vmatpush1.msra.mxu0 0.0
    %554 = vmatprep.subr.mxu0 0.0
    %555 = vmatpush1.msra.mxu0 0.0
    %556 = vmatprep.subr.mxu0 0.0
    %557 = vmatpush1.msra.mxu0 0.0
    %558 = vmatprep.subr.mxu0 0.0
    %559 = vmatpush1.msra.mxu0 0.0
    %560 = vmatprep.subr.mxu0 0.0
    %561 = vmatpush1.msra.mxu0 0.0
    %562 = vmatprep.subr.mxu0 0.0
    %563 = vmatpush1.msra.mxu0 0.0
    %564 = vmatprep.subr.mxu0 0.0
    %565 = vmatpush1.msra.mxu0 0.0
    %566 = vmatprep.subr.mxu0 0.0
    %567 = vmatpush1.msra.mxu0 0.0
    %568 = vmatprep.subr.mxu0 0.0
    %569 = vmatpush1.msra.mxu0 0.0
    %570 = vmatprep.subr.mxu0 0.0
    %571 = vmatpush1.msra.mxu0 0.0
    %572 = vmatprep.subr.mxu0 0.0
    %573 = vmatpush1.msra.mxu0 0.0
    %574 = vmatprep.subr.mxu0 0.0
    %575 = vmatpush1.msra.mxu0 0.0
    %576 = vmatprep.subr.mxu0 0.0
    %577 = vmatpush1.msra.mxu0 0.0
    %578 = vmatprep.subr.mxu0 0.0
    %579 = vmatpush1.msra.mxu0 0.0
    %580 = vmatprep.subr.mxu0 0.0
    %581 = vmatpush1.msra.mxu0 0.0
    %582 = vmatprep.subr.mxu0 0.0
    %583 = vmatpush1.msra.mxu0 0.0
    %584 = vmatprep.subr.mxu0 0.0
    %585 = vmatpush1.msra.mxu0 0.0
    %586 = vmatprep.subr.mxu0 0.0
    %587 = vmatpush1.msra.mxu0 0.0
    %588 = vmatprep.subr.mxu0 0.0
    %589 = vmatpush1.msra.mxu0 0.0
    %590 = vmatprep.subr.mxu0 0.0
    %591 = vmatpush1.msra.mxu0 0.0
    %592 = vmatprep.subr.mxu0 0.0
    %593 = vmatpush1.msra.mxu0 0.0
    %594 = vmatprep.subr.mxu0 0.0
    %595 = vmatpush1.msra.mxu0 0.0
    %596 = vmatprep.subr.mxu0 0.0
    %597 = vmatpush1.msra.mxu0 0.0
    %598 = vmatprep.subr.mxu0 0.0
    %599 = vmatpush1.msra.mxu0 0.0
    %600 = vmatprep.subr.mxu0 0.0
    %601 = vmatpush1.msra.mxu0 0.0
    %602 = vmatprep.subr.mxu0 0.0
    %603 = vmatpush1.msra.mxu0 0.0
    %604 = vmatprep.subr.mxu0 0.0
    %605 = vmatpush1.msra.mxu0 0.0
    %606 = vmatprep.mubr.f32.mxu0 0.0
    %607 = vmatmul.mubr.f32.gmra.mrb[0].mxu0 %v537
    %v608 = vpop.f32.mrb[0].mxu0
    %v609 = vadd.f32 0.0, %v608
    %v610 = vpop.f32.mrb[0].mxu0
    %611 = vmatprep.mubr.f32.mxu0 0.0
    %612 = vmatmul.mubr.f32.gmra.mrb[0].mxu0 %v540
    %v613 = vpop.f32.mrb[0].mxu0
    %v614 = vadd.f32 0.0, %v613
    %v615 = vpop.f32.mrb[0].mxu0
    %616 = vdwg.mxu0
    %619 = vrot.lane.b32.xlu0 %v609, 32
    %v620 = vpop.permute.xlu0 %619
    %621 = vrot.lane.b32.xlu0 %v614, 32
    %v622 = vpop.permute.xlu0 %621
    %v625 = vsel %vm219, %v403, %v620
    %v626 = vsel %vm219, %v408, %v622
    %v627 = vld [vmem:[%s7] sm:$0xff]
    %v628 = vld [vmem:[%s7 + $0x8] sm:$0xff]
    %v629 = vld [vmem:[%s7 + $0x10] sm:$0xff]
    %v630 = vld [vmem:[%s7 + $0x18] sm:$0xff]
    %v631 = vld [vmem:[%s7 + $0x20] sm:$0xff]
    %v632 = vld [vmem:[%s7 + $0x28] sm:$0xff]
    %v633 = vld [vmem:[%s7 + $0x30] sm:$0xff]
    %v634 = vld [vmem:[%s7 + $0x38] sm:$0xff]
    %v635 = vld [vmem:[%s8] sm:$0x1]
    %v637 = vlaneseq
    %v638 = vshrl.u32 %v637, 7
    %v639 = vsub.s32 0, %v638
    %v640 = vrot.slane %v635, %v639
    %v643 = vsel %vm129, %v625, 0
    %v646 = vsel %vm129, %v626, 0
    %648 = vmatprep.subr.mxu0 0.0
    %649 = vmatpush1.msra.mxu0 %v627
    %650 = vmatprep.subr.mxu0 0.0
    %651 = vmatpush1.msra.mxu0 %v628
    %652 = vmatprep.subr.mxu0 0.0
    %653 = vmatpush1.msra.mxu0 %v629
    %654 = vmatprep.subr.mxu0 0.0
    %655 = vmatpush1.msra.mxu0 %v630
    %656 = vmatprep.subr.mxu0 0.0
    %657 = vmatpush1.msra.mxu0 %v631
    %658 = vmatprep.subr.mxu0 0.0
    %659 = vmatpush1.msra.mxu0 %v632
    %660 = vmatprep.subr.mxu0 0.0
    %661 = vmatpush1.msra.mxu0 %v633
    %662 = vmatprep.subr.mxu0 0.0
    %663 = vmatpush1.msra.mxu0 %v634
    %664 = vmatprep.subr.mxu0 0.0
    %665 = vmatpush1.msra.mxu0 0.0
    %666 = vmatprep.subr.mxu0 0.0
    %667 = vmatpush1.msra.mxu0 0.0
    %668 = vmatprep.subr.mxu0 0.0
    %669 = vmatpush1.msra.mxu0 0.0
    %670 = vmatprep.subr.mxu0 0.0
    %671 = vmatpush1.msra.mxu0 0.0
    %672 = vmatprep.subr.mxu0 0.0
    %673 = vmatpush1.msra.mxu0 0.0
    %674 = vmatprep.subr.mxu0 0.0
    %675 = vmatpush1.msra.mxu0 0.0
    %676 = vmatprep.subr.mxu0 0.0
    %677 = vmatpush1.msra.mxu0 0.0
    %678 = vmatprep.subr.mxu0 0.0
    %679 = vmatpush1.msra.mxu0 0.0
    %680 = vmatprep.subr.mxu0 0.0
    %681 = vmatpush1.msra.mxu0 0.0
    %682 = vmatprep.subr.mxu0 0.0
    %683 = vmatpush1.msra.mxu0 0.0
    %684 = vmatprep.subr.mxu0 0.0
    %685 = vmatpush1.msra.mxu0 0.0
    %686 = vmatprep.subr.mxu0 0.0
    %687 = vmatpush1.msra.mxu0 0.0
    %688 = vmatprep.subr.mxu0 0.0
    %689 = vmatpush1.msra.mxu0 0.0
    %690 = vmatprep.subr.mxu0 0.0
    %691 = vmatpush1.msra.mxu0 0.0
    %692 = vmatprep.subr.mxu0 0.0
    %693 = vmatpush1.msra.mxu0 0.0
    %694 = vmatprep.subr.mxu0 0.0
    %695 = vmatpush1.msra.mxu0 0.0
    %696 = vmatprep.subr.mxu0 0.0
    %697 = vmatpush1.msra.mxu0 0.0
    %698 = vmatprep.subr.mxu0 0.0
    %699 = vmatpush1.msra.mxu0 0.0
    %700 = vmatprep.subr.mxu0 0.0
    %701 = vmatpush1.msra.mxu0 0.0
    %702 = vmatprep.subr.mxu0 0.0
    %703 = vmatpush1.msra.mxu0 0.0
    %704 = vmatprep.subr.mxu0 0.0
    %705 = vmatpush1.msra.mxu0 0.0
    %706 = vmatprep.subr.mxu0 0.0
    %707 = vmatpush1.msra.mxu0 0.0
    %708 = vmatprep.subr.mxu0 0.0
    %709 = vmatpush1.msra.mxu0 0.0
    %710 = vmatprep.subr.mxu0 0.0
    %711 = vmatpush1.msra.mxu0 0.0
    %712 = vmatprep.mubr.f32.mxu0 0.0
    %713 = vmatmul.mubr.f32.gmra.mrb[0].mxu0 %v643
    %v714 = vpop.f32.mrb[0].mxu0
    %v715 = vadd.f32 %v640, %v714
    %v716 = vpop.f32.mrb[0].mxu0
    %717 = vmatprep.mubr.f32.mxu0 0.0
    %718 = vmatmul.mubr.f32.gmra.mrb[0].mxu0 %v646
    %v719 = vpop.f32.mrb[0].mxu0
    %v720 = vadd.f32 %v640, %v719
    %v721 = vpop.f32.mrb[0].mxu0
    %722 = vdwg.mxu0
    %v723 = vadd.f32 %v97, %v715
    %v724 = vadd.f32 %v98, %v720
    %v725 = vld [vmem:[%s13] sm:$0x1]
    %v726 = vld [vmem:[%s14] sm:$0x1]
    %v727 = vmul.f32 %v723, %v723
    %v728 = vmul.f32 %v724, %v724
    %v729 = vsel %vm129, %v723, 0.0
    %730 = vadd.xlane.f32.xlu0 %v729
    %v731 = vpop.xlane.xlu0 %730
    %v732 = vsel %vm129, %v724, 0.0
    %733 = vadd.xlane.f32.xlu0 %v732
    %v734 = vpop.xlane.xlu0 %733
    %v735 = vsel %vm129, %v727, 0.0
    %736 = vadd.xlane.f32.xlu0 %v735
    %v737 = vpop.xlane.xlu0 %736
    %v738 = vsel %vm129, %v728, 0.0
    %739 = vadd.xlane.f32.xlu0 %v738
    %v740 = vpop.xlane.xlu0 %739
    %v741 = vmul.f32 %v731, 0.015625
    %v742 = vmul.f32 %v734, 0.015625
    %v743 = vmul.f32 %v737, 0.015625
    %v744 = vmul.f32 %v740, 0.015625
    %v745 = vmul.f32 %v741, %v741
    %v746 = vmul.f32 %v742, %v742
    %v747 = vsub.f32 %v743, %v745
    %v748 = vsub.f32 %v744, %v746
    %v749 = vsub.f32 %v723, %v741
    %v750 = vsub.f32 %v724, %v742
    %v751 = vadd.f32 %v747, 1e-05
    %v752 = vadd.f32 %v748, 1e-05
    %v753 = vrsqrt.pop %v751
    %v754 = vrsqrt.pop %v752
    %v755 = vmul.f32 %v749, %v753
    %v756 = vmul.f32 %v750, %v754
    %v758 = vlaneseq
    %v759 = vshrl.u32 %v758, 7
    %v760 = vsub.s32 0, %v759
    %v761 = vrot.slane %v725, %v760
    %v763 = vmul.f32 %v755, %v761
    %v764 = vmul.f32 %v756, %v761
    %v766 = vlaneseq
    %v767 = vshrl.u32 %v766, 7
    %v768 = vsub.s32 0, %v767
    %v769 = vrot.slane %v726, %v768
    %v771 = vadd.f32 %v763, %v769
    %v772 = vadd.f32 %v764, %v769
    %v773 = vld [vmem:[%s9] sm:$0xff]
    %v774 = vld [vmem:[%s9 + $0x8] sm:$0xff]
    %v775 = vld [vmem:[%s9 + $0x10] sm:$0xff]
    %v776 = vld [vmem:[%s9 + $0x18] sm:$0xff]
    %v777 = vld [vmem:[%s9 + $0x20] sm:$0xff]
    %v778 = vld [vmem:[%s9 + $0x28] sm:$0xff]
    %v779 = vld [vmem:[%s9 + $0x30] sm:$0xff]
    %v780 = vld [vmem:[%s9 + $0x38] sm:$0xff]
    %v781 = vld [vmem:[%s9 + $0x40] sm:$0xff]
    %v782 = vld [vmem:[%s9 + $0x48] sm:$0xff]
    %v783 = vld [vmem:[%s9 + $0x50] sm:$0xff]
    %v784 = vld [vmem:[%s9 + $0x58] sm:$0xff]
    %v785 = vld [vmem:[%s9 + $0x60] sm:$0xff]
    %v786 = vld [vmem:[%s9 + $0x68] sm:$0xff]
    %v787 = vld [vmem:[%s9 + $0x70] sm:$0xff]
    %v788 = vld [vmem:[%s9 + $0x78] sm:$0xff]
    %v789 = vld [vmem:[%s10] sm:$0x3]
    %v791 = vlaneseq
    %v792 = vshrl.u32 %v791, 7
    %v793 = vsub.s32 0, %v792
    %v794 = vrot.slane %v789, %v793
    %v795 = vlaneseq
    %v796 = vshrl.u32 %v795, 7
    %v797 = vsub.s32 1, %v796
    %v798 = vrot.slane %v789, %v797
    %v802 = vsel %vm129, %v771, 0
    %v805 = vsel %vm129, %v772, 0
    %807 = vmatprep.subr.mxu0 %v774
    %808 = vmatpush1.msra.mxu0 %v773
    %809 = vmatprep.subr.mxu0 %v776
    %810 = vmatpush1.msra.mxu0 %v775
    %811 = vmatprep.subr.mxu0 %v778
    %812 = vmatpush1.msra.mxu0 %v777
    %813 = vmatprep.subr.mxu0 %v780
    %814 = vmatpush1.msra.mxu0 %v779
    %815 = vmatprep.subr.mxu0 %v782
    %816 = vmatpush1.msra.mxu0 %v781
    %817 = vmatprep.subr.mxu0 %v784
    %818 = vmatpush1.msra.mxu0 %v783
    %819 = vmatprep.subr.mxu0 %v786
    %820 = vmatpush1.msra.mxu0 %v785
    %821 = vmatprep.subr.mxu0 %v788
    %822 = vmatpush1.msra.mxu0 %v787
    %823 = vmatprep.subr.mxu0 0.0
    %824 = vmatpush1.msra.mxu0 0.0
    %825 = vmatprep.subr.mxu0 0.0
    %826 = vmatpush1.msra.mxu0 0.0
    %827 = vmatprep.subr.mxu0 0.0
    %828 = vmatpush1.msra.mxu0 0.0
    %829 = vmatprep.subr.mxu0 0.0
    %830 = vmatpush1.msra.mxu0 0.0
    %831 = vmatprep.subr.mxu0 0.0
    %832 = vmatpush1.msra.mxu0 0.0
    %833 = vmatprep.subr.mxu0 0.0
    %834 = vmatpush1.msra.mxu0 0.0
    %835 = vmatprep.subr.mxu0 0.0
    %836 = vmatpush1.msra.mxu0 0.0
    %837 = vmatprep.subr.mxu0 0.0
    %838 = vmatpush1.msra.mxu0 0.0
    %839 = vmatprep.subr.mxu0 0.0
    %840 = vmatpush1.msra.mxu0 0.0
    %841 = vmatprep.subr.mxu0 0.0
    %842 = vmatpush1.msra.mxu0 0.0
    %843 = vmatprep.subr.mxu0 0.0
    %844 = vmatpush1.msra.mxu0 0.0
    %845 = vmatprep.subr.mxu0 0.0
    %846 = vmatpush1.msra.mxu0 0.0
    %847 = vmatprep.subr.mxu0 0.0
    %848 = vmatpush1.msra.mxu0 0.0
    %849 = vmatprep.subr.mxu0 0.0
    %850 = vmatpush1.msra.mxu0 0.0
    %851 = vmatprep.subr.mxu0 0.0
    %852 = vmatpush1.msra.mxu0 0.0
    %853 = vmatprep.subr.mxu0 0.0
    %854 = vmatpush1.msra.mxu0 0.0
    %855 = vmatprep.subr.mxu0 0.0
    %856 = vmatpush1.msra.mxu0 0.0
    %857 = vmatprep.subr.mxu0 0.0
    %858 = vmatpush1.msra.mxu0 0.0
    %859 = vmatprep.subr.mxu0 0.0
    %860 = vmatpush1.msra.mxu0 0.0
    %861 = vmatprep.subr.mxu0 0.0
    %862 = vmatpush1.msra.mxu0 0.0
    %863 = vmatprep.subr.mxu0 0.0
    %864 = vmatpush1.msra.mxu0 0.0
    %865 = vmatprep.subr.mxu0 0.0
    %866 = vmatpush1.msra.mxu0 0.0
    %867 = vmatprep.subr.mxu0 0.0
    %868 = vmatpush1.msra.mxu0 0.0
    %869 = vmatprep.subr.mxu0 0.0
    %870 = vmatpush1.msra.mxu0 0.0
    %871 = vmatprep.mubr.f32.mxu0 0.0
    %872 = vmatmul.mubr.f32.gmra.mrb[0].mxu0 %v802
    %v873 = vpop.f32.mrb[0].mxu0
    %v874 = vadd.f32 %v794, %v873
    %v875 = vpop.f32.mrb[0].mxu0
    %v876 = vadd.f32 %v798, %v875
    %877 = vmatprep.mubr.f32.mxu0 0.0
    %878 = vmatmul.mubr.f32.gmra.mrb[0].mxu0 %v805
    %v879 = vpop.f32.mrb[0].mxu0
    %v880 = vadd.f32 %v794, %v879
    %v881 = vpop.f32.mrb[0].mxu0
    %v882 = vadd.f32 %v798, %v881
    %883 = vdwg.mxu0
    %v884 = vmax.f32 %v874, 0.0
    %v885 = vmax.f32 %v876, 0.0
    %v886 = vmax.f32 %v880, 0.0
    %v887 = vmax.f32 %v882, 0.0
    %v888 = vld [vmem:[%s11] sm:$0xff]
    %v889 = vld [vmem:[%s11 + $0x8] sm:$0xff]
    %v890 = vld [vmem:[%s11 + $0x10] sm:$0xff]
    %v891 = vld [vmem:[%s11 + $0x18] sm:$0xff]
    %v892 = vld [vmem:[%s11 + $0x20] sm:$0xff]
    %v893 = vld [vmem:[%s11 + $0x28] sm:$0xff]
    %v894 = vld [vmem:[%s11 + $0x30] sm:$0xff]
    %v895 = vld [vmem:[%s11 + $0x38] sm:$0xff]
    %v896 = vld [vmem:[%s11 + $0x40] sm:$0xff]
    %v897 = vld [vmem:[%s11 + $0x48] sm:$0xff]
    %v898 = vld [vmem:[%s11 + $0x50] sm:$0xff]
    %v899 = vld [vmem:[%s11 + $0x58] sm:$0xff]
    %v900 = vld [vmem:[%s11 + $0x60] sm:$0xff]
    %v901 = vld [vmem:[%s11 + $0x68] sm:$0xff]
    %v902 = vld [vmem:[%s11 + $0x70] sm:$0xff]
    %v903 = vld [vmem:[%s11 + $0x78] sm:$0xff]
    %v904 = vld [vmem:[%s11 + $0x80] sm:$0xff]
    %v905 = vld [vmem:[%s11 + $0x88] sm:$0xff]
    %v906 = vld [vmem:[%s11 + $0x90] sm:$0xff]
    %v907 = vld [vmem:[%s11 + $0x98] sm:$0xff]
    %v908 = vld [vmem:[%s11 + $0xa0] sm:$0xff]
    %v909 = vld [vmem:[%s11 + $0xa8] sm:$0xff]
    %v910 = vld [vmem:[%s11 + $0xb0] sm:$0xff]
    %v911 = vld [vmem:[%s11 + $0xb8] sm:$0xff]
    %v912 = vld [vmem:[%s11 + $0xc0] sm:$0xff]
    %v913 = vld [vmem:[%s11 + $0xc8] sm:$0xff]
    %v914 = vld [vmem:[%s11 + $0xd0] sm:$0xff]
    %v915 = vld [vmem:[%s11 + $0xd8] sm:$0xff]
    %v916 = vld [vmem:[%s11 + $0xe0] sm:$0xff]
    %v917 = vld [vmem:[%s11 + $0xe8] sm:$0xff]
    %v918 = vld [vmem:[%s11 + $0xf0] sm:$0xff]
    %v919 = vld [vmem:[%s11 + $0xf8] sm:$0xff]
    %v920 = vld [vmem:[%s12] sm:$0x1]
    %v922 = vlaneseq
    %v923 = vshrl.u32 %v922, 7
    %v924 = vsub.s32 0, %v923
    %v925 = vrot.slane %v920, %v924
    %927 = vmatprep.subr.mxu0 0.0
    %928 = vmatpush1.msra.mxu0 %v888
    %929 = vmatprep.subr.mxu0 0.0
    %930 = vmatpush1.msra.mxu0 %v889
    %931 = vmatprep.subr.mxu0 0.0
    %932 = vmatpush1.msra.mxu0 %v890
    %933 = vmatprep.subr.mxu0 0.0
    %934 = vmatpush1.msra.mxu0 %v891
    %935 = vmatprep.subr.mxu0 0.0
    %936 = vmatpush1.msra.mxu0 %v892
    %937 = vmatprep.subr.mxu0 0.0
    %938 = vmatpush1.msra.mxu0 %v893
    %939 = vmatprep.subr.mxu0 0.0
    %940 = vmatpush1.msra.mxu0 %v894
    %941 = vmatprep.subr.mxu0 0.0
    %942 = vmatpush1.msra.mxu0 %v895
    %943 = vmatprep.subr.mxu0 0.0
    %944 = vmatpush1.msra.mxu0 %v896
    %945 = vmatprep.subr.mxu0 0.0
    %946 = vmatpush1.msra.mxu0 %v897
    %947 = vmatprep.subr.mxu0 0.0
    %948 = vmatpush1.msra.mxu0 %v898
    %949 = vmatprep.subr.mxu0 0.0
    %950 = vmatpush1.msra.mxu0 %v899
    %951 = vmatprep.subr.mxu0 0.0
    %952 = vmatpush1.msra.mxu0 %v900
    %953 = vmatprep.subr.mxu0 0.0
    %954 = vmatpush1.msra.mxu0 %v901
    %955 = vmatprep.subr.mxu0 0.0
    %956 = vmatpush1.msra.mxu0 %v902
    %957 = vmatprep.subr.mxu0 0.0
    %958 = vmatpush1.msra.mxu0 %v903
    %959 = vmatprep.subr.mxu0 0.0
    %960 = vmatpush1.msra.mxu0 %v904
    %961 = vmatprep.subr.mxu0 0.0
    %962 = vmatpush1.msra.mxu0 %v905
    %963 = vmatprep.subr.mxu0 0.0
    %964 = vmatpush1.msra.mxu0 %v906
    %965 = vmatprep.subr.mxu0 0.0
    %966 = vmatpush1.msra.mxu0 %v907
    %967 = vmatprep.subr.mxu0 0.0
    %968 = vmatpush1.msra.mxu0 %v908
    %969 = vmatprep.subr.mxu0 0.0
    %970 = vmatpush1.msra.mxu0 %v909
    %971 = vmatprep.subr.mxu0 0.0
    %972 = vmatpush1.msra.mxu0 %v910
    %973 = vmatprep.subr.mxu0 0.0
    %974 = vmatpush1.msra.mxu0 %v911
    %975 = vmatprep.subr.mxu0 0.0
    %976 = vmatpush1.msra.mxu0 %v912
    %977 = vmatprep.subr.mxu0 0.0
    %978 = vmatpush1.msra.mxu0 %v913
    %979 = vmatprep.subr.mxu0 0.0
    %980 = vmatpush1.msra.mxu0 %v914
    %981 = vmatprep.subr.mxu0 0.0
    %982 = vmatpush1.msra.mxu0 %v915
    %983 = vmatprep.subr.mxu0 0.0
    %984 = vmatpush1.msra.mxu0 %v916
    %985 = vmatprep.subr.mxu0 0.0
    %986 = vmatpush1.msra.mxu0 %v917
    %987 = vmatprep.subr.mxu0 0.0
    %988 = vmatpush1.msra.mxu0 %v918
    %989 = vmatprep.subr.mxu0 0.0
    %990 = vmatpush1.msra.mxu0 %v919
    %991 = vmatprep.mubr.f32.mxu0 %v885
    %992 = vmatmul.mubr.f32.gmra.mrb[0].mxu0 %v884
    %v993 = vpop.f32.mrb[0].mxu0
    %v994 = vadd.f32 %v925, %v993
    %v995 = vpop.f32.mrb[0].mxu0
    %996 = vmatprep.mubr.f32.mxu0 %v887
    %997 = vmatmul.mubr.f32.gmra.mrb[0].mxu0 %v886
    %v998 = vpop.f32.mrb[0].mxu0
    %v999 = vadd.f32 %v925, %v998
    %v1000 = vpop.f32.mrb[0].mxu0
    %1001 = vdwg.mxu0
    %v1002 = vadd.f32 %v771, %v994
    %v1003 = vadd.f32 %v772, %v999
    %v1004 = vld [vmem:[%s15] sm:$0x1]
    %v1005 = vld [vmem:[%s16] sm:$0x1]
    %v1006 = vmul.f32 %v1002, %v1002
    %v1007 = vmul.f32 %v1003, %v1003
    %v1008 = vsel %vm129, %v1002, 0.0
    %1009 = vadd.xlane.f32.xlu0 %v1008
    %v1010 = vpop.xlane.xlu0 %1009
    %v1011 = vsel %vm129, %v1003, 0.0
    %1012 = vadd.xlane.f32.xlu0 %v1011
    %v1013 = vpop.xlane.xlu0 %1012
    %v1014 = vsel %vm129, %v1006, 0.0
    %1015 = vadd.xlane.f32.xlu0 %v1014
    %v1016 = vpop.xlane.xlu0 %1015
    %v1017 = vsel %vm129, %v1007, 0.0
    %1018 = vadd.xlane.f32.xlu0 %v1017
    %v1019 = vpop.xlane.xlu0 %1018
    %v1020 = vmul.f32 %v1010, 0.015625
    %v1021 = vmul.f32 %v1013, 0.015625
    %v1022 = vmul.f32 %v1016, 0.015625
    %v1023 = vmul.f32 %v1019, 0.015625
    %v1024 = vmul.f32 %v1020, %v1020
    %v1025 = vmul.f32 %v1021, %v1021
    %v1026 = vsub.f32 %v1022, %v1024
    %v1027 = vsub.f32 %v1023, %v1025
    %v1028 = vsub.f32 %v1002, %v1020
    %v1029 = vsub.f32 %v1003, %v1021
    %v1030 = vadd.f32 %v1026, 1e-05
    %v1031 = vadd.f32 %v1027, 1e-05
    %v1032 = vrsqrt.pop %v1030
    %v1033 = vrsqrt.pop %v1031
    %v1034 = vmul.f32 %v1028, %v1032
    %v1035 = vmul.f32 %v1029, %v1033
    %v1037 = vlaneseq
    %v1038 = vshrl.u32 %v1037, 7
    %v1039 = vsub.s32 0, %v1038
    %v1040 = vrot.slane %v1004, %v1039
    %v1042 = vmul.f32 %v1034, %v1040
    %v1043 = vmul.f32 %v1035, %v1040
    %v1045 = vlaneseq
    %v1046 = vshrl.u32 %v1045, 7
    %v1047 = vsub.s32 0, %v1046
    %v1048 = vrot.slane %v1005, %v1047
    %v1050 = vadd.f32 %v1042, %v1048
    %v1051 = vadd.f32 %v1043, %v1048
    %s1052 = scalar_lea.vmem %s5, 128
    %v1053 = vld [vmem:[%s1052] sm:$0xff]
    %v1054 = vld [vmem:[%s1052 + $0x8] sm:$0xff]
    %v1055 = vld [vmem:[%s1052 + $0x10] sm:$0xff]
    %v1056 = vld [vmem:[%s1052 + $0x18] sm:$0xff]
    %v1057 = vld [vmem:[%s1052 + $0x20] sm:$0xff]
    %v1058 = vld [vmem:[%s1052 + $0x28] sm:$0xff]
    %v1059 = vld [vmem:[%s1052 + $0x30] sm:$0xff]
    %v1060 = vld [vmem:[%s1052 + $0x38] sm:$0xff]
    %v1061 = vld [vmem:[%s1052 + $0x40] sm:$0xff]
    %v1062 = vld [vmem:[%s1052 + $0x48] sm:$0xff]
    %v1063 = vld [vmem:[%s1052 + $0x50] sm:$0xff]
    %v1064 = vld [vmem:[%s1052 + $0x58] sm:$0xff]
    %v1065 = vld [vmem:[%s1052 + $0x60] sm:$0xff]
    %v1066 = vld [vmem:[%s1052 + $0x68] sm:$0xff]
    %v1067 = vld [vmem:[%s1052 + $0x70] sm:$0xff]
    %v1068 = vld [vmem:[%s1052 + $0x78] sm:$0xff]
    %s1069 = scalar_lea.vmem %s6, 2
    %v1070 = vld [vmem:[%s1069] sm:$0x3]
    %v1072 = vlaneseq
    %v1073 = vshrl.u32 %v1072, 7
    %v1074 = vsub.s32 0, %v1073
    %v1075 = vrot.slane %v1070, %v1074
    %v1076 = vlaneseq
    %v1077 = vshrl.u32 %v1076, 7
    %v1078 = vsub.s32 1, %v1077
    %v1079 = vrot.slane %v1070, %v1078
    %v1083 = vsel %vm129, %v1050, 0
    %v1086 = vsel %vm129, %v1051, 0
    %1088 = vmatprep.subr.mxu0 %v1054
    %1089 = vmatpush1.msra.mxu0 %v1053
    %1090 = vmatprep.subr.mxu0 %v1056
    %1091 = vmatpush1.msra.mxu0 %v1055
    %1092 = vmatprep.subr.mxu0 %v1058
    %1093 = vmatpush1.msra.mxu0 %v1057
    %1094 = vmatprep.subr.mxu0 %v1060
    %1095 = vmatpush1.msra.mxu0 %v1059
    %1096 = vmatprep.subr.mxu0 %v1062
    %1097 = vmatpush1.msra.mxu0 %v1061
    %1098 = vmatprep.subr.mxu0 %v1064
    %1099 = vmatpush1.msra.mxu0 %v1063
    %1100 = vmatprep.subr.mxu0 %v1066
    %1101 = vmatpush1.msra.mxu0 %v1065
    %1102 = vmatprep.subr.mxu0 %v1068
    %1103 = vmatpush1.msra.mxu0 %v1067
    %1104 = vmatprep.subr.mxu0 0.0
    %1105 = vmatpush1.msra.mxu0 0.0
    %1106 = vmatprep.subr.mxu0 0.0
    %1107 = vmatpush1.msra.mxu0 0.0
    %1108 = vmatprep.subr.mxu0 0.0
    %1109 = vmatpush1.msra.mxu0 0.0
    %1110 = vmatprep.subr.mxu0 0.0
    %1111 = vmatpush1.msra.mxu0 0.0
    %1112 = vmatprep.subr.mxu0 0.0
    %1113 = vmatpush1.msra.mxu0 0.0
    %1114 = vmatprep.subr.mxu0 0.0
    %1115 = vmatpush1.msra.mxu0 0.0
    %1116 = vmatprep.subr.mxu0 0.0
    %1117 = vmatpush1.msra.mxu0 0.0
    %1118 = vmatprep.subr.mxu0 0.0
    %1119 = vmatpush1.msra.mxu0 0.0
    %1120 = vmatprep.subr.mxu0 0.0
    %1121 = vmatpush1.msra.mxu0 0.0
    %1122 = vmatprep.subr.mxu0 0.0
    %1123 = vmatpush1.msra.mxu0 0.0
    %1124 = vmatprep.subr.mxu0 0.0
    %1125 = vmatpush1.msra.mxu0 0.0
    %1126 = vmatprep.subr.mxu0 0.0
    %1127 = vmatpush1.msra.mxu0 0.0
    %1128 = vmatprep.subr.mxu0 0.0
    %1129 = vmatpush1.msra.mxu0 0.0
    %1130 = vmatprep.subr.mxu0 0.0
    %1131 = vmatpush1.msra.mxu0 0.0
    %1132 = vmatprep.subr.mxu0 0.0
    %1133 = vmatpush1.msra.mxu0 0.0
    %1134 = vmatprep.subr.mxu0 0.0
    %1135 = vmatpush1.msra.mxu0 0.0
    %1136 = vmatprep.subr.mxu0 0.0
    %1137 = vmatpush1.msra.mxu0 0.0
    %1138 = vmatprep.subr.mxu0 0.0
    %1139 = vmatpush1.msra.mxu0 0.0
    %1140 = vmatprep.subr.mxu0 0.0
    %1141 = vmatpush1.msra.mxu0 0.0
    %1142 = vmatprep.subr.mxu0 0.0
    %1143 = vmatpush1.msra.mxu0 0.0
    %1144 = vmatprep.subr.mxu0 0.0
    %1145 = vmatpush1.msra.mxu0 0.0
    %1146 = vmatprep.subr.mxu0 0.0
    %1147 = vmatpush1.msra.mxu0 0.0
    %1148 = vmatprep.subr.mxu0 0.0
    %1149 = vmatpush1.msra.mxu0 0.0
    %1150 = vmatprep.subr.mxu0 0.0
    %1151 = vmatpush1.msra.mxu0 0.0
    %1152 = vmatprep.mubr.f32.mxu0 0.0
    %1153 = vmatmul.mubr.f32.gmra.mrb[0].mxu0 %v1083
    %v1154 = vpop.f32.mrb[0].mxu0
    %v1155 = vadd.f32 %v1075, %v1154
    %v1156 = vpop.f32.mrb[0].mxu0
    %v1157 = vadd.f32 %v1079, %v1156
    %1158 = vmatprep.mubr.f32.mxu0 0.0
    %1159 = vmatmul.mubr.f32.gmra.mrb[0].mxu0 %v1086
    %v1160 = vpop.f32.mrb[0].mxu0
    %v1161 = vadd.f32 %v1075, %v1160
    %v1162 = vpop.f32.mrb[0].mxu0
    %v1163 = vadd.f32 %v1079, %v1162
    %1164 = vdwg.mxu0
    %1167 = vrot.lane.b32.xlu0 %v1155, 64
    %v1168 = vpop.permute.xlu0 %1167
    %1169 = vrot.lane.b32.xlu0 %v1161, 64
    %v1170 = vpop.permute.xlu0 %1169
    %v1171 = vsel %vm219, %v1155, 0
    %v1173 = vsel %vm219, %v1161, 0
    %v1175 = vsel %vm219, %v1168, 0
    %v1177 = vsel %vm219, %v1170, 0
    %1179 = vmatprep.subr.mxu0 0.0
    %1180 = vmatpush1.xpose.msra.mxu0 %v1175
    %1181 = vmatprep.subr.mxu0 0.0
    %1182 = vmatpush1.xpose.msra.mxu0 %v1177
    %1183 = vmatprep.subr.mxu0 0.0
    %1184 = vmatpush1.xpose.msra.mxu0 0.0
    %1185 = vmatprep.subr.mxu0 0.0
    %1186 = vmatpush1.xpose.msra.mxu0 0.0
    %1187 = vmatprep.subr.mxu0 0.0
    %1188 = vmatpush1.xpose.msra.mxu0 0.0
    %1189 = vmatprep.subr.mxu0 0.0
    %1190 = vmatpush1.xpose.msra.mxu0 0.0
    %1191 = vmatprep.subr.mxu0 0.0
    %1192 = vmatpush1.xpose.msra.mxu0 0.0
    %1193 = vmatprep.subr.mxu0 0.0
    %1194 = vmatpush1.xpose.msra.mxu0 0.0
    %1195 = vmatprep.subr.mxu0 0.0
    %1196 = vmatpush1.xpose.msra.mxu0 0.0
    %1197 = vmatprep.subr.mxu0 0.0
    %1198 = vmatpush1.xpose.msra.mxu0 0.0
    %1199 = vmatprep.subr.mxu0 0.0
    %1200 = vmatpush1.xpose.msra.mxu0 0.0
    %1201 = vmatprep.subr.mxu0 0.0
    %1202 = vmatpush1.xpose.msra.mxu0 0.0
    %1203 = vmatprep.subr.mxu0 0.0
    %1204 = vmatpush1.xpose.msra.mxu0 0.0
    %1205 = vmatprep.subr.mxu0 0.0
    %1206 = vmatpush1.xpose.msra.mxu0 0.0
    %1207 = vmatprep.subr.mxu0 0.0
    %1208 = vmatpush1.xpose.msra.mxu0 0.0
    %1209 = vmatprep.subr.mxu0 0.0
    %1210 = vmatpush1.xpose.msra.mxu0 0.0
    %1211 = vmatprep.subr.mxu0 0.0
    %1212 = vmatpush1.xpose.msra.mxu0 0.0
    %1213 = vmatprep.subr.mxu0 0.0
    %1214 = vmatpush1.xpose.msra.mxu0 0.0
    %1215 = vmatprep.subr.mxu0 0.0
    %1216 = vmatpush1.xpose.msra.mxu0 0.0
    %1217 = vmatprep.subr.mxu0 0.0
    %1218 = vmatpush1.xpose.msra.mxu0 0.0
    %1219 = vmatprep.subr.mxu0 0.0
    %1220 = vmatpush1.xpose.msra.mxu0 0.0
    %1221 = vmatprep.subr.mxu0 0.0
    %1222 = vmatpush1.xpose.msra.mxu0 0.0
    %1223 = vmatprep.subr.mxu0 0.0
    %1224 = vmatpush1.xpose.msra.mxu0 0.0
    %1225 = vmatprep.subr.mxu0 0.0
    %1226 = vmatpush1.xpose.msra.mxu0 0.0
    %1227 = vmatprep.subr.mxu0 0.0
    %1228 = vmatpush1.xpose.msra.mxu0 0.0
    %1229 = vmatprep.subr.mxu0 0.0
    %1230 = vmatpush1.xpose.msra.mxu0 0.0
    %1231 = vmatprep.subr.mxu0 0.0
    %1232 = vmatpush1.xpose.msra.mxu0 0.0
    %1233 = vmatprep.subr.mxu0 0.0
    %1234 = vmatpush1.xpose.msra.mxu0 0.0
    %1235 = vmatprep.subr.mxu0 0.0
    %1236 = vmatpush1.xpose.msra.mxu0 0.0
    %1237 = vmatprep.subr.mxu0 0.0
    %1238 = vmatpush1.xpose.msra.mxu0 0.0
    %1239 = vmatprep.subr.mxu0 0.0
    %1240 = vmatpush1.xpose.msra.mxu0 0.0
    %1241 = vmatprep.subr.mxu0 0.0
    %1242 = vmatpush1.xpose.msra.mxu0 0.0
    %1243 = vmatprep.mubr.f32.mxu0 0.0
    %1244 = vmatmul.mubr.f32.gmra.mrb[0].mxu0 %v1171
    %v1245 = vpop.f32.mrb[0].mxu0
    %v1246 = vadd.f32 0.0, %v1245
    %v1247 = vpop.f32.mrb[0].mxu0
    %1248 = vmatprep.mubr.f32.mxu0 0.0
    %1249 = vmatmul.mubr.f32.gmra.mrb[0].mxu0 %v1173
    %v1250 = vpop.f32.mrb[0].mxu0
    %v1251 = vadd.f32 0.0, %v1250
    %v1252 = vpop.f32.mrb[0].mxu0
    %1253 = vdwg.mxu0
    %v1254 = vmul.f32 %v1246, 0.17677669
    %v1255 = vmul.f32 %v1251, 0.17677669
    %v1256 = vadd.f32 %v1254, %v99
    %v1257 = vadd.f32 %v1255, %v100
    %v1258 = vsel %vm307, %v1256, -inf
    %1259 = vmax.xlane.f32.xlu0 %v1258
    %v1260 = vpop.xlane.xlu0 %1259
    %v1261 = vsel %vm307, %v1257, -inf
    %1262 = vmax.xlane.f32.xlu0 %v1261
    %v1263 = vpop.xlane.xlu0 %1262
    %v1264 = vsub.f32 %v1256, %v1260
    %v1265 = vsub.f32 %v1257, %v1263
    %v1266 = vmul.f32 %v1264, 1.442695
    %v1267 = vpow.pop %v1266
    %v1268 = vmul.f32 %v1265, 1.442695
    %v1269 = vpow.pop %v1268
    %v1270 = vsel %vm307, %v1267, 0.0
    %1271 = vadd.xlane.f32.xlu0 %v1270
    %v1272 = vpop.xlane.xlu0 %1271
    %v1273 = vsel %vm307, %v1269, 0.0
    %1274 = vadd.xlane.f32.xlu0 %v1273
    %v1275 = vpop.xlane.xlu0 %1274
    %v1276 = vrcp.pop %v1272
    %v1277 = vrcp.pop %v1275
    %v1278 = vmul.f32 %v1267, %v1276
    %v1279 = vmul.f32 %v1269, %v1277
    %v1281 = vsel %vm307, %v1278, 0
    %v1284 = vsel %vm307, %v1279, 0
    %1286 = vmatprep.subr.mxu0 0.0
    %1287 = vmatpush1.msra.mxu0 %v1157
    %1288 = vmatprep.subr.mxu0 0.0
    %1289 = vmatpush1.msra.mxu0 %v1163
    %1290 = vmatprep.subr.mxu0 0.0
    %1291 = vmatpush1.msra.mxu0 0.0
    %1292 = vmatprep.subr.mxu0 0.0
    %1293 = vmatpush1.msra.mxu0 0.0
    %1294 = vmatprep.subr.mxu0 0.0
    %1295 = vmatpush1.msra.mxu0 0.0
    %1296 = vmatprep.subr.mxu0 0.0
    %1297 = vmatpush1.msra.mxu0 0.0
    %1298 = vmatprep.subr.mxu0 0.0
    %1299 = vmatpush1.msra.mxu0 0.0
    %1300 = vmatprep.subr.mxu0 0.0
    %1301 = vmatpush1.msra.mxu0 0.0
    %1302 = vmatprep.subr.mxu0 0.0
    %1303 = vmatpush1.msra.mxu0 0.0
    %1304 = vmatprep.subr.mxu0 0.0
    %1305 = vmatpush1.msra.mxu0 0.0
    %1306 = vmatprep.subr.mxu0 0.0
    %1307 = vmatpush1.msra.mxu0 0.0
    %1308 = vmatprep.subr.mxu0 0.0
    %1309 = vmatpush1.msra.mxu0 0.0
    %1310 = vmatprep.subr.mxu0 0.0
    %1311 = vmatpush1.msra.mxu0 0.0
    %1312 = vmatprep.subr.mxu0 0.0
    %1313 = vmatpush1.msra.mxu0 0.0
    %1314 = vmatprep.subr.mxu0 0.0
    %1315 = vmatpush1.msra.mxu0 0.0
    %1316 = vmatprep.subr.mxu0 0.0
    %1317 = vmatpush1.msra.mxu0 0.0
    %1318 = vmatprep.subr.mxu0 0.0
    %1319 = vmatpush1.msra.mxu0 0.0
    %1320 = vmatprep.subr.mxu0 0.0
    %1321 = vmatpush1.msra.mxu0 0.0
    %1322 = vmatprep.subr.mxu0 0.0
    %1323 = vmatpush1.msra.mxu0 0.0
    %1324 = vmatprep.subr.mxu0 0.0
    %1325 = vmatpush1.msra.mxu0 0.0
    %1326 = vmatprep.subr.mxu0 0.0
    %1327 = vmatpush1.msra.mxu0 0.0
    %1328 = vmatprep.subr.mxu0 0.0
    %1329 = vmatpush1.msra.mxu0 0.0
    %1330 = vmatprep.subr.mxu0 0.0
    %1331 = vmatpush1.msra.mxu0 0.0
    %1332 = vmatprep.subr.mxu0 0.0
    %1333 = vmatpush1.msra.mxu0 0.0
    %1334 = vmatprep.subr.mxu0 0.0
    %1335 = vmatpush1.msra.mxu0 0.0
    %1336 = vmatprep.subr.mxu0 0.0
    %1337 = vmatpush1.msra.mxu0 0.0
    %1338 = vmatprep.subr.mxu0 0.0
    %1339 = vmatpush1.msra.mxu0 0.0
    %1340 = vmatprep.subr.mxu0 0.0
    %1341 = vmatpush1.msra.mxu0 0.0
    %1342 = vmatprep.subr.mxu0 0.0
    %1343 = vmatpush1.msra.mxu0 0.0
    %1344 = vmatprep.subr.mxu0 0.0
    %1345 = vmatpush1.msra.mxu0 0.0
    %1346 = vmatprep.subr.mxu0 0.0
    %1347 = vmatpush1.msra.mxu0 0.0
    %1348 = vmatprep.subr.mxu0 0.0
    %1349 = vmatpush1.msra.mxu0 0.0
    %1350 = vmatprep.mubr.f32.mxu0 0.0
    %1351 = vmatmul.mubr.f32.gmra.mrb[0].mxu0 %v1281
    %v1352 = vpop.f32.mrb[0].mxu0
    %v1353 = vadd.f32 0.0, %v1352
    %v1354 = vpop.f32.mrb[0].mxu0
    %1355 = vmatprep.mubr.f32.mxu0 0.0
    %1356 = vmatmul.mubr.f32.gmra.mrb[0].mxu0 %v1284
    %v1357 = vpop.f32.mrb[0].mxu0
    %v1358 = vadd.f32 0.0, %v1357
    %v1359 = vpop.f32.mrb[0].mxu0
    %1360 = vdwg.mxu0
    %1361 = vrot.lane.b32.xlu0 %v1155, 96
    %v1362 = vpop.permute.xlu0 %1361
    %1363 = vrot.lane.b32.xlu0 %v1161, 96
    %v1364 = vpop.permute.xlu0 %1363
    %1365 = vrot.lane.b32.xlu0 %v1155, 32
    %v1366 = vpop.permute.xlu0 %1365
    %1367 = vrot.lane.b32.xlu0 %v1161, 32
    %v1368 = vpop.permute.xlu0 %1367
    %v1369 = vsel %vm219, %v1362, 0
    %v1371 = vsel %vm219, %v1364, 0
    %v1373 = vsel %vm219, %v1366, 0
    %v1375 = vsel %vm219, %v1368, 0
    %1377 = vmatprep.subr.mxu0 0.0
    %1378 = vmatpush1.xpose.msra.mxu0 %v1373
    %1379 = vmatprep.subr.mxu0 0.0
    %1380 = vmatpush1.xpose.msra.mxu0 %v1375
    %1381 = vmatprep.subr.mxu0 0.0
    %1382 = vmatpush1.xpose.msra.mxu0 0.0
    %1383 = vmatprep.subr.mxu0 0.0
    %1384 = vmatpush1.xpose.msra.mxu0 0.0
    %1385 = vmatprep.subr.mxu0 0.0
    %1386 = vmatpush1.xpose.msra.mxu0 0.0
    %1387 = vmatprep.subr.mxu0 0.0
    %1388 = vmatpush1.xpose.msra.mxu0 0.0
    %1389 = vmatprep.subr.mxu0 0.0
    %1390 = vmatpush1.xpose.msra.mxu0 0.0
    %1391 = vmatprep.subr.mxu0 0.0
    %1392 = vmatpush1.xpose.msra.mxu0 0.0
    %1393 = vmatprep.subr.mxu0 0.0
    %1394 = vmatpush1.xpose.msra.mxu0 0.0
    %1395 = vmatprep.subr.mxu0 0.0
    %1396 = vmatpush1.xpose.msra.mxu0 0.0
    %1397 = vmatprep.subr.mxu0 0.0
    %1398 = vmatpush1.xpose.msra.mxu0 0.0
    %1399 = vmatprep.subr.mxu0 0.0
    %1400 = vmatpush1.xpose.msra.mxu0 0.0
    %1401 = vmatprep.subr.mxu0 0.0
    %1402 = vmatpush1.xpose.msra.mxu0 0.0
    %1403 = vmatprep.subr.mxu0 0.0
    %1404 = vmatpush1.xpose.msra.mxu0 0.0
    %1405 = vmatprep.subr.mxu0 0.0
    %1406 = vmatpush1.xpose.msra.mxu0 0.0
    %1407 = vmatprep.subr.mxu0 0.0
    %1408 = vmatpush1.xpose.msra.mxu0 0.0
    %1409 = vmatprep.subr.mxu0 0.0
    %1410 = vmatpush1.xpose.msra.mxu0 0.0
    %1411 = vmatprep.subr.mxu0 0.0
    %1412 = vmatpush1.xpose.msra.mxu0 0.0
    %1413 = vmatprep.subr.mxu0 0.0
    %1414 = vmatpush1.xpose.msra.mxu0 0.0
    %1415 = vmatprep.subr.mxu0 0.0
    %1416 = vmatpush1.xpose.msra.mxu0 0.0
    %1417 = vmatprep.subr.mxu0 0.0
    %1418 = vmatpush1.xpose.msra.mxu0 0.0
    %1419 = vmatprep.subr.mxu0 0.0
    %1420 = vmatpush1.xpose.msra.mxu0 0.0
    %1421 = vmatprep.subr.mxu0 0.0
    %1422 = vmatpush1.xpose.msra.mxu0 0.0
    %1423 = vmatprep.subr.mxu0 0.0
    %1424 = vmatpush1.xpose.msra.mxu0 0.0
    %1425 = vmatprep.subr.mxu0 0.0
    %1426 = vmatpush1.xpose.msra.mxu0 0.0
    %1427 = vmatprep.subr.mxu0 0.0
    %1428 = vmatpush1.xpose.msra.mxu0 0.0
    %1429 = vmatprep.subr.mxu0 0.0
    %1430 = vmatpush1.xpose.msra.mxu0 0.0
    %1431 = vmatprep.subr.mxu0 0.0
    %1432 = vmatpush1.xpose.msra.mxu0 0.0
    %1433 = vmatprep.subr.mxu0 0.0
    %1434 = vmatpush1.xpose.msra.mxu0 0.0
    %1435 = vmatprep.subr.mxu0 0.0
    %1436 = vmatpush1.xpose.msra.mxu0 0.0
    %1437 = vmatprep.subr.mxu0 0.0
    %1438 = vmatpush1.xpose.msra.mxu0 0.0
    %1439 = vmatprep.subr.mxu0 0.0
    %1440 = vmatpush1.xpose.msra.mxu0 0.0
    %1441 = vmatprep.mubr.f32.mxu0 0.0
    %1442 = vmatmul.mubr.f32.gmra.mrb[0].mxu0 %v1369
    %v1443 = vpop.f32.mrb[0].mxu0
    %v1444 = vadd.f32 0.0, %v1443
    %v1445 = vpop.f32.mrb[0].mxu0
    %1446 = vmatprep.mubr.f32.mxu0 0.0
    %1447 = vmatmul.mubr.f32.gmra.mrb[0].mxu0 %v1371
    %v1448 = vpop.f32.mrb[0].mxu0
    %v1449 = vadd.f32 0.0, %v1448
    %v1450 = vpop.f32.mrb[0].mxu0
    %1451 = vdwg.mxu0
    %v1452 = vmul.f32 %v1444, 0.17677669
    %v1453 = vmul.f32 %v1449, 0.17677669
    %v1454 = vadd.f32 %v1452, %v99
    %v1455 = vadd.f32 %v1453, %v100
    %v1456 = vsel %vm307, %v1454, -inf
    %1457 = vmax.xlane.f32.xlu0 %v1456
    %v1458 = vpop.xlane.xlu0 %1457
    %v1459 = vsel %vm307, %v1455, -inf
    %1460 = vmax.xlane.f32.xlu0 %v1459
    %v1461 = vpop.xlane.xlu0 %1460
    %v1462 = vsub.f32 %v1454, %v1458
    %v1463 = vsub.f32 %v1455, %v1461
    %v1464 = vmul.f32 %v1462, 1.442695
    %v1465 = vpow.pop %v1464
    %v1466 = vmul.f32 %v1463, 1.442695
    %v1467 = vpow.pop %v1466
    %v1468 = vsel %vm307, %v1465, 0.0
    %1469 = vadd.xlane.f32.xlu0 %v1468
    %v1470 = vpop.xlane.xlu0 %1469
    %v1471 = vsel %vm307, %v1467, 0.0
    %1472 = vadd.xlane.f32.xlu0 %v1471
    %v1473 = vpop.xlane.xlu0 %1472
    %v1474 = vrcp.pop %v1470
    %v1475 = vrcp.pop %v1473
    %v1476 = vmul.f32 %v1465, %v1474
    %v1477 = vmul.f32 %v1467, %v1475
    %1480 = vrot.lane.b32.xlu0 %v1157, 96
    %v1481 = vpop.permute.xlu0 %1480
    %1482 = vrot.lane.b32.xlu0 %v1163, 96
    %v1483 = vpop.permute.xlu0 %1482
    %v1487 = vsel %vm307, %v1476, 0
    %v1490 = vsel %vm307, %v1477, 0
    %1492 = vmatprep.subr.mxu0 0.0
    %1493 = vmatpush1.msra.mxu0 %v1481
    %1494 = vmatprep.subr.mxu0 0.0
    %1495 = vmatpush1.msra.mxu0 %v1483
    %1496 = vmatprep.subr.mxu0 0.0
    %1497 = vmatpush1.msra.mxu0 0.0
    %1498 = vmatprep.subr.mxu0 0.0
    %1499 = vmatpush1.msra.mxu0 0.0
    %1500 = vmatprep.subr.mxu0 0.0
    %1501 = vmatpush1.msra.mxu0 0.0
    %1502 = vmatprep.subr.mxu0 0.0
    %1503 = vmatpush1.msra.mxu0 0.0
    %1504 = vmatprep.subr.mxu0 0.0
    %1505 = vmatpush1.msra.mxu0 0.0
    %1506 = vmatprep.subr.mxu0 0.0
    %1507 = vmatpush1.msra.mxu0 0.0
    %1508 = vmatprep.subr.mxu0 0.0
    %1509 = vmatpush1.msra.mxu0 0.0
    %1510 = vmatprep.subr.mxu0 0.0
    %1511 = vmatpush1.msra.mxu0 0.0
    %1512 = vmatprep.subr.mxu0 0.0
    %1513 = vmatpush1.msra.mxu0 0.0
    %1514 = vmatprep.subr.mxu0 0.0
    %1515 = vmatpush1.msra.mxu0 0.0
    %1516 = vmatprep.subr.mxu0 0.0
    %1517 = vmatpush1.msra.mxu0 0.0
    %1518 = vmatprep.subr.mxu0 0.0
    %1519 = vmatpush1.msra.mxu0 0.0
    %1520 = vmatprep.subr.mxu0 0.0
    %1521 = vmatpush1.msra.mxu0 0.0
    %1522 = vmatprep.subr.mxu0 0.0
    %1523 = vmatpush1.msra.mxu0 0.0
    %1524 = vmatprep.subr.mxu0 0.0
    %1525 = vmatpush1.msra.mxu0 0.0
    %1526 = vmatprep.subr.mxu0 0.0
    %1527 = vmatpush1.msra.mxu0 0.0
    %1528 = vmatprep.subr.mxu0 0.0
    %1529 = vmatpush1.msra.mxu0 0.0
    %1530 = vmatprep.subr.mxu0 0.0
    %1531 = vmatpush1.msra.mxu0 0.0
    %1532 = vmatprep.subr.mxu0 0.0
    %1533 = vmatpush1.msra.mxu0 0.0
    %1534 = vmatprep.subr.mxu0 0.0
    %1535 = vmatpush1.msra.mxu0 0.0
    %1536 = vmatprep.subr.mxu0 0.0
    %1537 = vmatpush1.msra.mxu0 0.0
    %1538 = vmatprep.subr.mxu0 0.0
    %1539 = vmatpush1.msra.mxu0 0.0
    %1540 = vmatprep.subr.mxu0 0.0
    %1541 = vmatpush1.msra.mxu0 0.0
    %1542 = vmatprep.subr.mxu0 0.0
    %1543 = vmatpush1.msra.mxu0 0.0
    %1544 = vmatprep.subr.mxu0 0.0
    %1545 = vmatpush1.msra.mxu0 0.0
    %1546 = vmatprep.subr.mxu0 0.0
    %1547 = vmatpush1.msra.mxu0 0.0
    %1548 = vmatprep.subr.mxu0 0.0
    %1549 = vmatpush1.msra.mxu0 0.0
    %1550 = vmatprep.subr.mxu0 0.0
    %1551 = vmatpush1.msra.mxu0 0.0
    %1552 = vmatprep.subr.mxu0 0.0
    %1553 = vmatpush1.msra.mxu0 0.0
    %1554 = vmatprep.subr.mxu0 0.0
    %1555 = vmatpush1.msra.mxu0 0.0
    %1556 = vmatprep.mubr.f32.mxu0 0.0
    %1557 = vmatmul.mubr.f32.gmra.mrb[0].mxu0 %v1487
    %v1558 = vpop.f32.mrb[0].mxu0
    %v1559 = vadd.f32 0.0, %v1558
    %v1560 = vpop.f32.mrb[0].mxu0
    %1561 = vmatprep.mubr.f32.mxu0 0.0
    %1562 = vmatmul.mubr.f32.gmra.mrb[0].mxu0 %v1490
    %v1563 = vpop.f32.mrb[0].mxu0
    %v1564 = vadd.f32 0.0, %v1563
    %v1565 = vpop.f32.mrb[0].mxu0
    %1566 = vdwg.mxu0
    %1569 = vrot.lane.b32.xlu0 %v1559, 32
    %v1570 = vpop.permute.xlu0 %1569
    %1571 = vrot.lane.b32.xlu0 %v1564, 32
    %v1572 = vpop.permute.xlu0 %1571
    %v1575 = vsel %vm219, %v1353, %v1570
    %v1576 = vsel %vm219, %v1358, %v1572
    %s1577 = scalar_lea.vmem %s7, 64
    %v1578 = vld [vmem:[%s1577] sm:$0xff]
    %v1579 = vld [vmem:[%s1577 + $0x8] sm:$0xff]
    %v1580 = vld [vmem:[%s1577 + $0x10] sm:$0xff]
    %v1581 = vld [vmem:[%s1577 + $0x18] sm:$0xff]
    %v1582 = vld [vmem:[%s1577 + $0x20] sm:$0xff]
    %v1583 = vld [vmem:[%s1577 + $0x28] sm:$0xff]
    %v1584 = vld [vmem:[%s1577 + $0x30] sm:$0xff]
    %v1585 = vld [vmem:[%s1577 + $0x38] sm:$0xff]
    %s1586 = scalar_lea.vmem %s8, 1
    %v1587 = vld [vmem:[%s1586] sm:$0x1]
    %v1589 = vlaneseq
    %v1590 = vshrl.u32 %v1589, 7
    %v1591 = vsub.s32 0, %v1590
    %v1592 = vrot.slane %v1587, %v1591
    %v1595 = vsel %vm129, %v1575, 0
    %v1598 = vsel %vm129, %v1576, 0
    %1600 = vmatprep.subr.mxu0 0.0
    %1601 = vmatpush1.msra.mxu0 %v1578
    %1602 = vmatprep.subr.mxu0 0.0
    %1603 = vmatpush1.msra.mxu0 %v1579
    %1604 = vmatprep.subr.mxu0 0.0
    %1605 = vmatpush1.msra.mxu0 %v1580
    %1606 = vmatprep.subr.mxu0 0.0
    %1607 = vmatpush1.msra.mxu0 %v1581
    %1608 = vmatprep.subr.mxu0 0.0
    %1609 = vmatpush1.msra.mxu0 %v1582
    %1610 = vmatprep.subr.mxu0 0.0
    %1611 = vmatpush1.msra.mxu0 %v1583
    %1612 = vmatprep.subr.mxu0 0.0
    %1613 = vmatpush1.msra.mxu0 %v1584
    %1614 = vmatprep.subr.mxu0 0.0
    %1615 = vmatpush1.msra.mxu0 %v1585
    %1616 = vmatprep.subr.mxu0 0.0
    %1617 = vmatpush1.msra.mxu0 0.0
    %1618 = vmatprep.subr.mxu0 0.0
    %1619 = vmatpush1.msra.mxu0 0.0
    %1620 = vmatprep.subr.mxu0 0.0
    %1621 = vmatpush1.msra.mxu0 0.0
    %1622 = vmatprep.subr.mxu0 0.0
    %1623 = vmatpush1.msra.mxu0 0.0
    %1624 = vmatprep.subr.mxu0 0.0
    %1625 = vmatpush1.msra.mxu0 0.0
    %1626 = vmatprep.subr.mxu0 0.0
    %1627 = vmatpush1.msra.mxu0 0.0
    %1628 = vmatprep.subr.mxu0 0.0
    %1629 = vmatpush1.msra.mxu0 0.0
    %1630 = vmatprep.subr.mxu0 0.0
    %1631 = vmatpush1.msra.mxu0 0.0
    %1632 = vmatprep.subr.mxu0 0.0
    %1633 = vmatpush1.msra.mxu0 0.0
    %1634 = vmatprep.subr.mxu0 0.0
    %1635 = vmatpush1.msra.mxu0 0.0
    %1636 = vmatprep.subr.mxu0 0.0
    %1637 = vmatpush1.msra.mxu0 0.0
    %1638 = vmatprep.subr.mxu0 0.0
    %1639 = vmatpush1.msra.mxu0 0.0
    %1640 = vmatprep.subr.mxu0 0.0
    %1641 = vmatpush1.msra.mxu0 0.0
    %1642 = vmatprep.subr.mxu0 0.0
    %1643 = vmatpush1.msra.mxu0 0.0
    %1644 = vmatprep.subr.mxu0 0.0
    %1645 = vmatpush1.msra.mxu0 0.0
    %1646 = vmatprep.subr.mxu0 0.0
    %1647 = vmatpush1.msra.mxu0 0.0
    %1648 = vmatprep.subr.mxu0 0.0
    %1649 = vmatpush1.msra.mxu0 0.0
    %1650 = vmatprep.subr.mxu0 0.0
    %1651 = vmatpush1.msra.mxu0 0.0
    %1652 = vmatprep.subr.mxu0 0.0
    %1653 = vmatpush1.msra.mxu0 0.0
    %1654 = vmatprep.subr.mxu0 0.0
    %1655 = vmatpush1.msra.mxu0 0.0
    %1656 = vmatprep.subr.mxu0 0.0
    %1657 = vmatpush1.msra.mxu0 0.0
    %1658 = vmatprep.subr.mxu0 0.0
    %1659 = vmatpush1.msra.mxu0 0.0
    %1660 = vmatprep.subr.mxu0 0.0
    %1661 = vmatpush1.msra.mxu0 0.0
    %1662 = vmatprep.subr.mxu0 0.0
    %1663 = vmatpush1.msra.mxu0 0.0
    %1664 = vmatprep.mubr.f32.mxu0 0.0
    %1665 = vmatmul.mubr.f32.gmra.mrb[0].mxu0 %v1595
    %v1666 = vpop.f32.mrb[0].mxu0
    %v1667 = vadd.f32 %v1592, %v1666
    %v1668 = vpop.f32.mrb[0].mxu0
    %1669 = vmatprep.mubr.f32.mxu0 0.0
    %1670 = vmatmul.mubr.f32.gmra.mrb[0].mxu0 %v1598
    %v1671 = vpop.f32.mrb[0].mxu0
    %v1672 = vadd.f32 %v1592, %v1671
    %v1673 = vpop.f32.mrb[0].mxu0
    %1674 = vdwg.mxu0
    %v1675 = vadd.f32 %v1050, %v1667
    %v1676 = vadd.f32 %v1051, %v1672
    %s1677 = scalar_lea.vmem %s13, 1
    %v1678 = vld [vmem:[%s1677] sm:$0x1]
    %s1679 = scalar_lea.vmem %s14, 1
    %v1680 = vld [vmem:[%s1679] sm:$0x1]
    %v1681 = vmul.f32 %v1675, %v1675
    %v1682 = vmul.f32 %v1676, %v1676
    %v1683 = vsel %vm129, %v1675, 0.0
    %1684 = vadd.xlane.f32.xlu0 %v1683
    %v1685 = vpop.xlane.xlu0 %1684
    %v1686 = vsel %vm129, %v1676, 0.0
    %1687 = vadd.xlane.f32.xlu0 %v1686
    %v1688 = vpop.xlane.xlu0 %1687
    %v1689 = vsel %vm129, %v1681, 0.0
    %1690 = vadd.xlane.f32.xlu0 %v1689
    %v1691 = vpop.xlane.xlu0 %1690
    %v1692 = vsel %vm129, %v1682, 0.0
    %1693 = vadd.xlane.f32.xlu0 %v1692
    %v1694 = vpop.xlane.xlu0 %1693
    %v1695 = vmul.f32 %v1685, 0.015625
    %v1696 = vmul.f32 %v1688, 0.015625
    %v1697 = vmul.f32 %v1691, 0.015625
    %v1698 = vmul.f32 %v1694, 0.015625
    %v1699 = vmul.f32 %v1695, %v1695
    %v1700 = vmul.f32 %v1696, %v1696
    %v1701 = vsub.f32 %v1697, %v1699
    %v1702 = vsub.f32 %v1698, %v1700
    %v1703 = vsub.f32 %v1675, %v1695
    %v1704 = vsub.f32 %v1676, %v1696
    %v1705 = vadd.f32 %v1701, 1e-05
    %v1706 = vadd.f32 %v1702, 1e-05
    %v1707 = vrsqrt.pop %v1705
    %v1708 = vrsqrt.pop %v1706
    %v1709 = vmul.f32 %v1703, %v1707
    %v1710 = vmul.f32 %v1704, %v1708
    %v1712 = vlaneseq
    %v1713 = vshrl.u32 %v1712, 7
    %v1714 = vsub.s32 0, %v1713
    %v1715 = vrot.slane %v1678, %v1714
    %v1717 = vmul.f32 %v1709, %v1715
    %v1718 = vmul.f32 %v1710, %v1715
    %v1720 = vlaneseq
    %v1721 = vshrl.u32 %v1720, 7
    %v1722 = vsub.s32 0, %v1721
    %v1723 = vrot.slane %v1680, %v1722
    %v1725 = vadd.f32 %v1717, %v1723
    %v1726 = vadd.f32 %v1718, %v1723
    %s1727 = scalar_lea.vmem %s9, 128
    %v1728 = vld [vmem:[%s1727] sm:$0xff]
    %v1729 = vld [vmem:[%s1727 + $0x8] sm:$0xff]
    %v1730 = vld [vmem:[%s1727 + $0x10] sm:$0xff]
    %v1731 = vld [vmem:[%s1727 + $0x18] sm:$0xff]
    %v1732 = vld [vmem:[%s1727 + $0x20] sm:$0xff]
    %v1733 = vld [vmem:[%s1727 + $0x28] sm:$0xff]
    %v1734 = vld [vmem:[%s1727 + $0x30] sm:$0xff]
    %v1735 = vld [vmem:[%s1727 + $0x38] sm:$0xff]
    %v1736 = vld [vmem:[%s1727 + $0x40] sm:$0xff]
    %v1737 = vld [vmem:[%s1727 + $0x48] sm:$0xff]
    %v1738 = vld [vmem:[%s1727 + $0x50] sm:$0xff]
    %v1739 = vld [vmem:[%s1727 + $0x58] sm:$0xff]
    %v1740 = vld [vmem:[%s1727 + $0x60] sm:$0xff]
    %v1741 = vld [vmem:[%s1727 + $0x68] sm:$0xff]
    %v1742 = vld [vmem:[%s1727 + $0x70] sm:$0xff]
    %v1743 = vld [vmem:[%s1727 + $0x78] sm:$0xff]
    %s1744 = scalar_lea.vmem %s10, 2
    %v1745 = vld [vmem:[%s1744] sm:$0x3]
    %v1747 = vlaneseq
    %v1748 = vshrl.u32 %v1747, 7
    %v1749 = vsub.s32 0, %v1748
    %v1750 = vrot.slane %v1745, %v1749
    %v1751 = vlaneseq
    %v1752 = vshrl.u32 %v1751, 7
    %v1753 = vsub.s32 1, %v1752
    %v1754 = vrot.slane %v1745, %v1753
    %v1758 = vsel %vm129, %v1725, 0
    %v1761 = vsel %vm129, %v1726, 0
    %1763 = vmatprep.subr.mxu0 %v1729
    %1764 = vmatpush1.msra.mxu0 %v1728
    %1765 = vmatprep.subr.mxu0 %v1731
    %1766 = vmatpush1.msra.mxu0 %v1730
    %1767 = vmatprep.subr.mxu0 %v1733
    %1768 = vmatpush1.msra.mxu0 %v1732
    %1769 = vmatprep.subr.mxu0 %v1735
    %1770 = vmatpush1.msra.mxu0 %v1734
    %1771 = vmatprep.subr.mxu0 %v1737
    %1772 = vmatpush1.msra.mxu0 %v1736
    %1773 = vmatprep.subr.mxu0 %v1739
    %1774 = vmatpush1.msra.mxu0 %v1738
    %1775 = vmatprep.subr.mxu0 %v1741
    %1776 = vmatpush1.msra.mxu0 %v1740
    %1777 = vmatprep.subr.mxu0 %v1743
    %1778 = vmatpush1.msra.mxu0 %v1742
    %1779 = vmatprep.subr.mxu0 0.0
    %1780 = vmatpush1.msra.mxu0 0.0
    %1781 = vmatprep.subr.mxu0 0.0
    %1782 = vmatpush1.msra.mxu0 0.0
    %1783 = vmatprep.subr.mxu0 0.0
    %1784 = vmatpush1.msra.mxu0 0.0
    %1785 = vmatprep.subr.mxu0 0.0
    %1786 = vmatpush1.msra.mxu0 0.0
    %1787 = vmatprep.subr.mxu0 0.0
    %1788 = vmatpush1.msra.mxu0 0.0
    %1789 = vmatprep.subr.mxu0 0.0
    %1790 = vmatpush1.msra.mxu0 0.0
    %1791 = vmatprep.subr.mxu0 0.0
    %1792 = vmatpush1.msra.mxu0 0.0
    %1793 = vmatprep.subr.mxu0 0.0
    %1794 = vmatpush1.msra.mxu0 0.0
    %1795 = vmatprep.subr.mxu0 0.0
    %1796 = vmatpush1.msra.mxu0 0.0
    %1797 = vmatprep.subr.mxu0 0.0
    %1798 = vmatpush1.msra.mxu0 0.0
    %1799 = vmatprep.subr.mxu0 0.0
    %1800 = vmatpush1.msra.mxu0 0.0
    %1801 = vmatprep.subr.mxu0 0.0
    %1802 = vmatpush1.msra.mxu0 0.0
    %1803 = vmatprep.subr.mxu0 0.0
    %1804 = vmatpush1.msra.mxu0 0.0
    %1805 = vmatprep.subr.mxu0 0.0
    %1806 = vmatpush1.msra.mxu0 0.0
    %1807 = vmatprep.subr.mxu0 0.0
    %1808 = vmatpush1.msra.mxu0 0.0
    %1809 = vmatprep.subr.mxu0 0.0
    %1810 = vmatpush1.msra.mxu0 0.0
    %1811 = vmatprep.subr.mxu0 0.0
    %1812 = vmatpush1.msra.mxu0 0.0
    %1813 = vmatprep.subr.mxu0 0.0
    %1814 = vmatpush1.msra.mxu0 0.0
    %1815 = vmatprep.subr.mxu0 0.0
    %1816 = vmatpush1.msra.mxu0 0.0
    %1817 = vmatprep.subr.mxu0 0.0
    %1818 = vmatpush1.msra.mxu0 0.0
    %1819 = vmatprep.subr.mxu0 0.0
    %1820 = vmatpush1.msra.mxu0 0.0
    %1821 = vmatprep.subr.mxu0 0.0
    %1822 = vmatpush1.msra.mxu0 0.0
    %1823 = vmatprep.subr.mxu0 0.0
    %1824 = vmatpush1.msra.mxu0 0.0
    %1825 = vmatprep.subr.mxu0 0.0
    %1826 = vmatpush1.msra.mxu0 0.0
    %1827 = vmatprep.mubr.f32.mxu0 0.0
    %1828 = vmatmul.mubr.f32.gmra.mrb[0].mxu0 %v1758
    %v1829 = vpop.f32.mrb[0].mxu0
    %v1830 = vadd.f32 %v1750, %v1829
    %v1831 = vpop.f32.mrb[0].mxu0
    %v1832 = vadd.f32 %v1754, %v1831
    %1833 = vmatprep.mubr.f32.mxu0 0.0
    %1834 = vmatmul.mubr.f32.gmra.mrb[0].mxu0 %v1761
    %v1835 = vpop.f32.mrb[0].mxu0
    %v1836 = vadd.f32 %v1750, %v1835
    %v1837 = vpop.f32.mrb[0].mxu0
    %v1838 = vadd.f32 %v1754, %v1837
    %1839 = vdwg.mxu0
    %v1840 = vmax.f32 %v1830, 0.0
    %v1841 = vmax.f32 %v1832, 0.0
    %v1842 = vmax.f32 %v1836, 0.0
    %v1843 = vmax.f32 %v1838, 0.0
    %s1844 = scalar_lea.vmem %s11, 256
    %v1845 = vld [vmem:[%s1844] sm:$0xff]
    %v1846 = vld [vmem:[%s1844 + $0x8] sm:$0xff]
    %v1847 = vld [vmem:[%s1844 + $0x10] sm:$0xff]
    %v1848 = vld [vmem:[%s1844 + $0x18] sm:$0xff]
    %v1849 = vld [vmem:[%s1844 + $0x20] sm:$0xff]
    %v1850 = vld [vmem:[%s1844 + $0x28] sm:$0xff]
    %v1851 = vld [vmem:[%s1844 + $0x30] sm:$0xff]
    %v1852 = vld [vmem:[%s1844 + $0x38] sm:$0xff]
    %v1853 = vld [vmem:[%s1844 + $0x40] sm:$0xff]
    %v1854 = vld [vmem:[%s1844 + $0x48] sm:$0xff]
    %v1855 = vld [vmem:[%s1844 + $0x50] sm:$0xff]
    %v1856 = vld [vmem:[%s1844 + $0x58] sm:$0xff]
    %v1857 = vld [vmem:[%s1844 + $0x60] sm:$0xff]
    %v1858 = vld [vmem:[%s1844 + $0x68] sm:$0xff]
    %v1859 = vld [vmem:[%s1844 + $0x70] sm:$0xff]
    %v1860 = vld [vmem:[%s1844 + $0x78] sm:$0xff]
    %v1861 = vld [vmem:[%s1844 + $0x80] sm:$0xff]
    %v1862 = vld [vmem:[%s1844 + $0x88] sm:$0xff]
    %v1863 = vld [vmem:[%s1844 + $0x90] sm:$0xff]
    %v1864 = vld [vmem:[%s1844 + $0x98] sm:$0xff]
    %v1865 = vld [vmem:[%s1844 + $0xa0] sm:$0xff]
    %v1866 = vld [vmem:[%s1844 + $0xa8] sm:$0xff]
    %v1867 = vld [vmem:[%s1844 + $0xb0] sm:$0xff]
    %v1868 = vld [vmem:[%s1844 + $0xb8] sm:$0xff]
    %v1869 = vld [vmem:[%s1844 + $0xc0] sm:$0xff]
    %v1870 = vld [vmem:[%s1844 + $0xc8] sm:$0xff]
    %v1871 = vld [vmem:[%s1844 + $0xd0] sm:$0xff]
    %v1872 = vld [vmem:[%s1844 + $0xd8] sm:$0xff]
    %v1873 = vld [vmem:[%s1844 + $0xe0] sm:$0xff]
    %v1874 = vld [vmem:[%s1844 + $0xe8] sm:$0xff]
    %v1875 = vld [vmem:[%s1844 + $0xf0] sm:$0xff]
    %v1876 = vld [vmem:[%s1844 + $0xf8] sm:$0xff]
    %s1877 = scalar_lea.vmem %s12, 1
    %v1878 = vld [vmem:[%s1877] sm:$0x1]
    %v1880 = vlaneseq
    %v1881 = vshrl.u32 %v1880, 7
    %v1882 = vsub.s32 0, %v1881
    %v1883 = vrot.slane %v1878, %v1882
    %1885 = vmatprep.subr.mxu0 0.0
    %1886 = vmatpush1.msra.mxu0 %v1845
    %1887 = vmatprep.subr.mxu0 0.0
    %1888 = vmatpush1.msra.mxu0 %v1846
    %1889 = vmatprep.subr.mxu0 0.0
    %1890 = vmatpush1.msra.mxu0 %v1847
    %1891 = vmatprep.subr.mxu0 0.0
    %1892 = vmatpush1.msra.mxu0 %v1848
    %1893 = vmatprep.subr.mxu0 0.0
    %1894 = vmatpush1.msra.mxu0 %v1849
    %1895 = vmatprep.subr.mxu0 0.0
    %1896 = vmatpush1.msra.mxu0 %v1850
    %1897 = vmatprep.subr.mxu0 0.0
    %1898 = vmatpush1.msra.mxu0 %v1851
    %1899 = vmatprep.subr.mxu0 0.0
    %1900 = vmatpush1.msra.mxu0 %v1852
    %1901 = vmatprep.subr.mxu0 0.0
    %1902 = vmatpush1.msra.mxu0 %v1853
    %1903 = vmatprep.subr.mxu0 0.0
    %1904 = vmatpush1.msra.mxu0 %v1854
    %1905 = vmatprep.subr.mxu0 0.0
    %1906 = vmatpush1.msra.mxu0 %v1855
    %1907 = vmatprep.subr.mxu0 0.0
    %1908 = vmatpush1.msra.mxu0 %v1856
    %1909 = vmatprep.subr.mxu0 0.0
    %1910 = vmatpush1.msra.mxu0 %v1857
    %1911 = vmatprep.subr.mxu0 0.0
    %1912 = vmatpush1.msra.mxu0 %v1858
    %1913 = vmatprep.subr.mxu0 0.0
    %1914 = vmatpush1.msra.mxu0 %v1859
    %1915 = vmatprep.subr.mxu0 0.0
    %1916 = vmatpush1.msra.mxu0 %v1860
    %1917 = vmatprep.subr.mxu0 0.0
    %1918 = vmatpush1.msra.mxu0 %v1861
    %1919 = vmatprep.subr.mxu0 0.0
    %1920 = vmatpush1.msra.mxu0 %v1862
    %1921 = vmatprep.subr.mxu0 0.0
    %1922 = vmatpush1.msra.mxu0 %v1863
    %1923 = vmatprep.subr.mxu0 0.0
    %1924 = vmatpush1.msra.mxu0 %v1864
    %1925 = vmatprep.subr.mxu0 0.0
    %1926 = vmatpush1.msra.mxu0 %v1865
    %1927 = vmatprep.subr.mxu0 0.0
    %1928 = vmatpush1.msra.mxu0 %v1866
    %1929 = vmatprep.subr.mxu0 0.0
    %1930 = vmatpush1.msra.mxu0 %v1867
    %1931 = vmatprep.subr.mxu0 0.0
    %1932 = vmatpush1.msra.mxu0 %v1868
    %1933 = vmatprep.subr.mxu0 0.0
    %1934 = vmatpush1.msra.mxu0 %v1869
    %1935 = vmatprep.subr.mxu0 0.0
    %1936 = vmatpush1.msra.mxu0 %v1870
    %1937 = vmatprep.subr.mxu0 0.0
    %1938 = vmatpush1.msra.mxu0 %v1871
    %1939 = vmatprep.subr.mxu0 0.0
    %1940 = vmatpush1.msra.mxu0 %v1872
    %1941 = vmatprep.subr.mxu0 0.0
    %1942 = vmatpush1.msra.mxu0 %v1873
    %1943 = vmatprep.subr.mxu0 0.0
    %1944 = vmatpush1.msra.mxu0 %v1874
    %1945 = vmatprep.subr.mxu0 0.0
    %1946 = vmatpush1.msra.mxu0 %v1875
    %1947 = vmatprep.subr.mxu0 0.0
    %1948 = vmatpush1.msra.mxu0 %v1876
    %1949 = vmatprep.mubr.f32.mxu0 %v1841
    %1950 = vmatmul.mubr.f32.gmra.mrb[0].mxu0 %v1840
    %v1951 = vpop.f32.mrb[0].mxu0
    %v1952 = vadd.f32 %v1883, %v1951
    %v1953 = vpop.f32.mrb[0].mxu0
    %1954 = vmatprep.mubr.f32.mxu0 %v1843
    %1955 = vmatmul.mubr.f32.gmra.mrb[0].mxu0 %v1842
    %v1956 = vpop.f32.mrb[0].mxu0
    %v1957 = vadd.f32 %v1883, %v1956
    %v1958 = vpop.f32.mrb[0].mxu0
    %1959 = vdwg.mxu0
    %v1960 = vadd.f32 %v1725, %v1952
    %v1961 = vadd.f32 %v1726, %v1957
    %s1962 = scalar_lea.vmem %s15, 1
    %v1963 = vld [vmem:[%s1962] sm:$0x1]
    %s1964 = scalar_lea.vmem %s16, 1
    %v1965 = vld [vmem:[%s1964] sm:$0x1]
    %v1966 = vmul.f32 %v1960, %v1960
    %v1967 = vmul.f32 %v1961, %v1961
    %v1968 = vsel %vm129, %v1960, 0.0
    %1969 = vadd.xlane.f32.xlu0 %v1968
    %v1970 = vpop.xlane.xlu0 %1969
    %v1971 = vsel %vm129, %v1961, 0.0
    %1972 = vadd.xlane.f32.xlu0 %v1971
    %v1973 = vpop.xlane.xlu0 %1972
    %v1974 = vsel %vm129, %v1966, 0.0
    %1975 = vadd.xlane.f32.xlu0 %v1974
    %v1976 = vpop.xlane.xlu0 %1975
    %v1977 = vsel %vm129, %v1967, 0.0
    %1978 = vadd.xlane.f32.xlu0 %v1977
    %v1979 = vpop.xlane.xlu0 %1978
    %v1980 = vmul.f32 %v1970, 0.015625
    %v1981 = vmul.f32 %v1973, 0.015625
    %v1982 = vmul.f32 %v1976, 0.015625
    %v1983 = vmul.f32 %v1979, 0.015625
    %v1984 = vmul.f32 %v1980, %v1980
    %v1985 = vmul.f32 %v1981, %v1981
    %v1986 = vsub.f32 %v1982, %v1984
    %v1987 = vsub.f32 %v1983, %v1985
    %v1988 = vsub.f32 %v1960, %v1980
    %v1989 = vsub.f32 %v1961, %v1981
    %v1990 = vadd.f32 %v1986, 1e-05
    %v1991 = vadd.f32 %v1987, 1e-05
    %v1992 = vrsqrt.pop %v1990
    %v1993 = vrsqrt.pop %v1991
    %v1994 = vmul.f32 %v1988, %v1992
    %v1995 = vmul.f32 %v1989, %v1993
    %v1997 = vlaneseq
    %v1998 = vshrl.u32 %v1997, 7
    %v1999 = vsub.s32 0, %v1998
    %v2000 = vrot.slane %v1963, %v1999
    %v2002 = vmul.f32 %v1994, %v2000
    %v2003 = vmul.f32 %v1995, %v2000
    %v2005 = vlaneseq
    %v2006 = vshrl.u32 %v2005, 7
    %v2007 = vsub.s32 0, %v2006
    %v2008 = vrot.slane %v1965, %v2007
    %v2010 = vadd.f32 %v2002, %v2008
    %v2011 = vadd.f32 %v2003, %v2008
    %v2012 = vsel %vm129, %v2010, 0.0
    %v2013 = vrot.slane %v2012, 4
    %v2014 = vadd.f32 %v2012, %v2013
    %v2015 = vrot.slane %v2014, 2
    %v2016 = vadd.f32 %v2014, %v2015
    %v2017 = vrot.slane %v2016, 1
    %v2018 = vadd.f32 %v2016, %v2017
    %v2019 = vsel %vm129, %v2011, 0.0
    %v2020 = vrot.slane %v2019, 4
    %v2021 = vadd.f32 %v2019, %v2020
    %v2022 = vrot.slane %v2021, 2
    %v2023 = vadd.f32 %v2021, %v2022
    %v2024 = vrot.slane %v2023, 1
    %v2025 = vadd.f32 %v2023, %v2024
    %v2026 = vrcp.pop 8.0
    %v2027 = vmul.f32 %v2018, %v2026
    %v2028 = vmul.f32 %v2025, %v2026
    %v2029 = vld [vmem:[%s17] sm:$0x1]
    %v2030 = vld [vmem:[#allocation2] sm:$0x1]
    %2032 = vset.pattern.permute.xlu0 0
    %2033 = vperm.xlu0 %2032, %v2030
    %v2034 = vpop.permute.xlu0 %2033
    %v2036 = vlaneseq
    %v2037 = vshrl.u32 %v2036, 7
    %v2038 = vsub.s32 0, %v2037
    %v2039 = vrot.slane %v2034, %v2038
    %vm2042 = vcmask 1041409
    %v2043 = vsel %vm2042, %v2028, %v2027
    %v2045 = vsel %vm129, %v2029, 0
    %v2047 = vsel %vm129, %v2043, 0
    %2049 = vmatprep.subr.mxu0 0.0
    %2050 = vmatpush1.xpose.msra.mxu0 %v2047
    %2051 = vmatprep.subr.mxu0 0.0
    %2052 = vmatpush1.xpose.msra.mxu0 0.0
    %2053 = vmatprep.subr.mxu0 0.0
    %2054 = vmatpush1.xpose.msra.mxu0 0.0
    %2055 = vmatprep.subr.mxu0 0.0
    %2056 = vmatpush1.xpose.msra.mxu0 0.0
    %2057 = vmatprep.subr.mxu0 0.0
    %2058 = vmatpush1.xpose.msra.mxu0 0.0
    %2059 = vmatprep.subr.mxu0 0.0
    %2060 = vmatpush1.xpose.msra.mxu0 0.0
    %2061 = vmatprep.subr.mxu0 0.0
    %2062 = vmatpush1.xpose.msra.mxu0 0.0
    %2063 = vmatprep.subr.mxu0 0.0
    %2064 = vmatpush1.xpose.msra.mxu0 0.0
    %2065 = vmatprep.subr.mxu0 0.0
    %2066 = vmatpush1.xpose.msra.mxu0 0.0
    %2067 = vmatprep.subr.mxu0 0.0
    %2068 = vmatpush1.xpose.msra.mxu0 0.0
    %2069 = vmatprep.subr.mxu0 0.0
    %2070 = vmatpush1.xpose.msra.mxu0 0.0
    %2071 = vmatprep.subr.mxu0 0.0
    %2072 = vmatpush1.xpose.msra.mxu0 0.0
    %2073 = vmatprep.subr.mxu0 0.0
    %2074 = vmatpush1.xpose.msra.mxu0 0.0
    %2075 = vmatprep.subr.mxu0 0.0
    %2076 = vmatpush1.xpose.msra.mxu0 0.0
    %2077 = vmatprep.subr.mxu0 0.0
    %2078 = vmatpush1.xpose.msra.mxu0 0.0
    %2079 = vmatprep.subr.mxu0 0.0
    %2080 = vmatpush1.xpose.msra.mxu0 0.0
    %2081 = vmatprep.subr.mxu0 0.0
    %2082 = vmatpush1.xpose.msra.mxu0 0.0
    %2083 = vmatprep.subr.mxu0 0.0
    %2084 = vmatpush1.xpose.msra.mxu0 0.0
    %2085 = vmatprep.subr.mxu0 0.0
    %2086 = vmatpush1.xpose.msra.mxu0 0.0
    %2087 = vmatprep.subr.mxu0 0.0
    %2088 = vmatpush1.xpose.msra.mxu0 0.0
    %2089 = vmatprep.subr.mxu0 0.0
    %2090 = vmatpush1.xpose.msra.mxu0 0.0
    %2091 = vmatprep.subr.mxu0 0.0
    %2092 = vmatpush1.xpose.msra.mxu0 0.0
    %2093 = vmatprep.subr.mxu0 0.0
    %2094 = vmatpush1.xpose.msra.mxu0 0.0
    %2095 = vmatprep.subr.mxu0 0.0
    %2096 = vmatpush1.xpose.msra.mxu0 0.0
    %2097 = vmatprep.subr.mxu0 0.0
    %2098 = vmatpush1.xpose.msra.mxu0 0.0
    %2099 = vmatprep.subr.mxu0 0.0
    %2100 = vmatpush1.xpose.msra.mxu0 0.0
    %2101 = vmatprep.subr.mxu0 0.0
    %2102 = vmatpush1.xpose.msra.mxu0 0.0
    %2103 = vmatprep.subr.mxu0 0.0
    %2104 = vmatpush1.xpose.msra.mxu0 0.0
    %2105 = vmatprep.subr.mxu0 0.0
    %2106 = vmatpush1.xpose.msra.mxu0 0.0
    %2107 = vmatprep.subr.mxu0 0.0
    %2108 = vmatpush1.xpose.msra.mxu0 0.0
    %2109 = vmatprep.subr.mxu0 0.0
    %2110 = vmatpush1.xpose.msra.mxu0 0.0
    %2111 = vmatprep.subr.mxu0 0.0
    %2112 = vmatpush1.xpose.msra.mxu0 0.0
    %2113 = vmatprep.mubr.f32.mxu0 0.0
    %2114 = vmatmul.mubr.f32.gmra.mrb[0].mxu0 %v2045
    %v2115 = vpop.f32.mrb[0].mxu0
    %v2116 = vadd.f32 %v2039, %v2115
    %v2117 = vpop.f32.mrb[0].mxu0
    %2118 = vdwg.mxu0
    %vm2119 = vcmask 8192
    %2120 = vst.msk [vmem:[#allocation3] sm:$0x1] %vm2119, %v2116
    // Predicated region
    $region78: #{tpu_custom_call.1} parent=1 // pred_check
      _
    $region79: #{tpu_custom_call.1} parent=1 // pred_check_branch
      %2122 = sbr.rel (0) target = $region81
    $region80: #{tpu_custom_call.1} parent=1 // pred_region
      %s2124 = ssub.s32 16, 16
      %2125 = vsyncadd [#allocation4], %s2124
      %s2127 = sshll.u32 [#allocation3], 4
      %s2128 = int_to_ptr.vmem [resolvable:$true] %s2127
      %2130 = dma.vmem_to_hbm [thread:$0]  %s2128, 16, %s19, [#allocation4]
    $region81: #{tpu_custom_call.1} parent=1 // pred_fallthru
      _
    // Predicated region
    $region82: #{tpu_custom_call.1} parent=1 // pred_check
      _
    $region83: #{tpu_custom_call.1} parent=1 // pred_check_branch
      %2132 = sbr.rel (0) target = $region85
    $region84: #{tpu_custom_call.1} parent=1 // pred_region
      %2133 = dma.done [#allocation4], 16
    $region85: #{tpu_custom_call.1} parent=1 // pred_fallthru
      _
    %2134 = vsyncpa [#allocation4], 1

</llo_original>
